<compile_context>
chip_gen: v7x
topology: tpu7x:2x2x1
jax: 0.10.0
libtpu: 0.0.40
codegen_flags: <defaults>
</compile_context>

<pallas_src>
import numpy as np
import jax
import jax.numpy as jnp
from jax.experimental import pallas as pl
from jax.experimental.pallas import tpu as pltpu


# ----------------------------------------------------------------------------
# Problem sizes (consistent with the module's __init__)
# ----------------------------------------------------------------------------
BATCH = 2
P = 6            # particle features        (params)
N = 8            # number of constituents   (n_constituents)
S = 4            # vertex features          (params_v)
NV = 4           # number of vertices       (n_vertices)
HIDDEN = 32
DE = 5
DO = 6
N_TARGETS = 3
NR = N * (N - 1)     # particle-particle edges (56)
NT = N * NV          # particle-vertex edges   (32)


# ----------------------------------------------------------------------------
# Pallas kernel: whole-batch GraphNet forward, single invocation
# ----------------------------------------------------------------------------
def graphnet_kernel(
    x_ref, y_ref,
    ar_ref, as_ref, av_ref, agg_pp_ref, agg_pv_ref, summat_ref,
    w1r_ref, w1sp_ref, w1sv_ref, b1_ref,
    w2_ref, b2_ref, w3_ref, b3_ref,
    wo1x_ref, wo1pp_ref, wo1pv_ref, bo1_ref,
    wo2_ref, bo2_ref, wo3_ref, bo3_ref,
    wfc_ref, bfc_ref,
    out_ref,
):
    f32 = jnp.float32

    def dot(a, b):
        return jnp.dot(a, b, preferred_element_type=f32)

    def relu(v):
        return jnp.maximum(v, 0.0)

    X = x_ref[...]                    # (B*N,  P)
    Y = y_ref[...]                    # (B*Nv, S)

    # --- node / vertex level first-layer projections (re-associated) ---
    Hr = dot(X, w1r_ref[...])         # (B*N,  2H)  receiver proj (pp | pv halves)
    Hs = dot(X, w1sp_ref[...])        # (B*N,  2H)  pp sender proj
    Gv = dot(Y, w1sv_ref[...])        # (B*Nv, 2H)  pv vertex proj

    # --- fused edge MLP: rows 0:B*NR are pp edges, rows B*NR: are pv edges ---
    Z = dot(ar_ref[...], Hr) + dot(as_ref[...], Hs) + dot(av_ref[...], Gv) \
        + b1_ref[...]                                     # (B*(NR+NT), 2H)
    Z = relu(Z)
    Z = relu(dot(Z, w2_ref[...]) + b2_ref[...])           # (B*(NR+NT), H)
    E = relu(dot(Z, w3_ref[...]) + b3_ref[...])           # (B*(NR+NT), 2*De)

    # --- aggregate edges per receiving particle ---
    # Cross-block junk columns are annihilated by zero rows in wo1pp / wo1pv.
    Epp = dot(agg_pp_ref[...], E)     # (B*N, 2*De)  cols [0:De]   valid
    Epv = dot(agg_pv_ref[...], E)     # (B*N, 2*De)  cols [De:2De] valid

    # --- object MLP (split-weight sums instead of concat) ---
    C = dot(X, wo1x_ref[...]) + dot(Epp, wo1pp_ref[...]) \
        + dot(Epv, wo1pv_ref[...]) + bo1_ref[...]         # (B*N, H)
    C = relu(C)
    C = relu(dot(C, wo2_ref[...]) + bo2_ref[...])         # (B*N, H/2)
    O = relu(dot(C, wo3_ref[...]) + bo3_ref[...])         # (B*N, Do)

    # --- per-batch sum over constituents + fc_fixed (no relu) ---
    Nsum = dot(summat_ref[...], O)                        # (B, Do)
    out_ref[...] = dot(Nsum, wfc_ref[...]) + bfc_ref[...]  # (B, n_targets)


# ----------------------------------------------------------------------------
# Host-side preparation: block-diagonal adjacencies + fused / split weights
# ----------------------------------------------------------------------------
def build_fused_operands(mats, params, batch):
    Rr, Rs, Rk, Rv = [np.asarray(m, np.float32) for m in mats]
    I = np.eye(batch, dtype=np.float32)

    RrT_blk = np.kron(I, Rr.T)                 # (B*NR, B*N)
    RsT_blk = np.kron(I, Rs.T)                 # (B*NR, B*N)
    RkT_blk = np.kron(I, Rk.T)                 # (B*NT, B*N)
    RvT_blk = np.kron(I, Rv.T)                 # (B*NT, B*NV)
    Rr_blk = np.kron(I, Rr)                    # (B*N, B*NR)
    Rk_blk = np.kron(I, Rk)                    # (B*N, B*NT)

    bnr, bnt = batch * NR, batch * NT
    bn, bnv = batch * N, batch * NV

    # Fused edge gather matrices: pp edges first, pv edges second.
    A_r = np.concatenate([RrT_blk, RkT_blk], axis=0)                          # (B*(NR+NT), B*N)
    A_s = np.concatenate([RsT_blk, np.zeros((bnt, bn), np.float32)], axis=0)  # (B*(NR+NT), B*N)
    A_v = np.concatenate([np.zeros((bnr, bnv), np.float32), RvT_blk], axis=0)  # (B*(NR+NT), B*NV)
    # Aggregation (scatter-add) matrices, row-selecting only the correct edge type.
    Agg_pp = np.concatenate([Rr_blk, np.zeros((bn, bnt), np.float32)], axis=1)  # (B*N, B*(NR+NT))
    Agg_pv = np.concatenate([np.zeros((bn, bnr), np.float32), Rk_blk], axis=1)  # (B*N, B*(NR+NT))
    # Per-batch sum over constituents.
    SumMat = np.kron(I, np.ones((1, N), np.float32))                            # (B, B*N)

    (Wr1, br1), (Wr2, br2), (Wr3, br3), \
        (Wp1, bp1), (Wp2, bp2), (Wp3, bp3), \
        (Wo1, bo1), (Wo2, bo2), (Wo3, bo3), (Wfc, bfc) = \
        [(np.asarray(W, np.float32), np.asarray(b, np.float32)) for W, b in params]

    H = HIDDEN
    zPH = np.zeros((P, H), np.float32)
    zSH = np.zeros((S, H), np.float32)
    zH2 = np.zeros((H, H // 2), np.float32)
    zH3 = np.zeros((H // 2, DE), np.float32)

    # Layer-1 weights, split by source tensor and lane-stacked (pp half | pv half).
    W1_recv = np.concatenate([Wr1[:P], Wp1[:P]], axis=1)          # (P, 2H)
    W1_send_pp = np.concatenate([Wr1[P:2 * P], zPH], axis=1)      # (P, 2H)
    W1_send_pv = np.concatenate([zSH, Wp1[P:P + S]], axis=1)      # (S, 2H)
    b1 = np.concatenate([br1, bp1], axis=1)                       # (1, 2H)

    # Block-diagonal layers 2/3 of the fused edge MLP.
    W2 = np.block([[Wr2, zH2], [zH2, Wp2]])                       # (2H, H)
    b2 = np.concatenate([br2, bp2], axis=1)                       # (1, H)
    W3 = np.block([[Wr3, zH3], [zH3, Wp3]])                       # (H, 2*De)
    b3 = np.concatenate([br3, bp3], axis=1)                       # (1, 2*De)

    # Object-block layer-1 weight split by input segment; zero rows kill the
    # cross-block junk columns of the aggregated edge features.
    zDH = np.zeros((DE, H), np.float32)
    Wo1_x = Wo1[:P]                                               # (P, H)
    Wo1_pp = np.concatenate([Wo1[P:P + DE], zDH], axis=0)          # (2*De, H)
    Wo1_pv = np.concatenate([zDH, Wo1[P + DE:P + 2 * DE]], axis=0)  # (2*De, H)

    consts = [A_r, A_s, A_v, Agg_pp, Agg_pv, SumMat,
              W1_recv, W1_send_pp, W1_send_pv, b1, W2, b2, W3, b3,
              Wo1_x, Wo1_pp, Wo1_pv, bo1, Wo2, bo2, Wo3, bo3, Wfc, bfc]
    return [jnp.asarray(c, jnp.float32) for c in consts]


# ----------------------------------------------------------------------------
# Wrapper
# ----------------------------------------------------------------------------
def graphnet_forward(x, y, fused_consts):
    """x: (B, P, N), y: (B, S, Nv) -- PyTorch layout.  Returns (B, n_targets)."""
    b = x.shape[0]
    X = jnp.transpose(x, (0, 2, 1)).reshape(b * N, P)     # (B*N,  P)
    Y = jnp.transpose(y, (0, 2, 1)).reshape(b * NV, S)    # (B*Nv, S)
    inputs = [X, Y] + list(fused_consts)

    vmem = lambda: pl.BlockSpec(memory_space=pltpu.MemorySpace.VMEM)

    return pl.pallas_call(
        graphnet_kernel,
        out_shape=jax.ShapeDtypeStruct((b, N_TARGETS), jnp.float32),
        in_specs=[vmem() for _ in inputs],
        out_specs=vmem(),
        cost_estimate=pl.CostEstimate(
            flops=2_000_000, transcendentals=0, bytes_accessed=72_000),
    )(*inputs)


# ----------------------------------------------------------------------------
# Deterministic parameter / adjacency construction
# ----------------------------------------------------------------------------
def build_adjacency():
    # assign_matrices
    Rr = np.zeros((N, NR), np.float32)
    Rs = np.zeros((N, NR), np.float32)
    pairs = [(r, s) for r in range(N) for s in range(N) if r != s]
    for i, (r, s) in enumerate(pairs):
        Rr[r, i] = 1.0
        Rs[s, i] = 1.0
    # assign_matrices_SV
    Rk = np.zeros((N, NT), np.float32)
    Rv = np.zeros((NV, NT), np.float32)
    pairs_sv = [(k, v) for k in range(N) for v in range(NV)]
    for i, (k, v) in enumerate(pairs_sv):
        Rk[k, i] = 1.0
        Rv[v, i] = 1.0
    return jnp.asarray(Rr), jnp.asarray(Rs), jnp.asarray(Rk), jnp.asarray(Rv)


def init_linear(key, fan_in, fan_out):
    """PyTorch nn.Linear default init; W stored as (in, out), b as (1, out)."""
    k1, k2 = jax.random.split(key)
    bound = 1.0 / np.sqrt(fan_in)
    W = jax.random.uniform(k1, (fan_in, fan_out), jnp.float32, -bound, bound)
    b = jax.random.uniform(k2, (1, fan_out), jnp.float32, -bound, bound)
    return W, b


def build_params(key):
    layer_dims = [
        (2 * P, HIDDEN), (HIDDEN, HIDDEN // 2), (HIDDEN // 2, DE),        # fr1..3
        (S + P, HIDDEN), (HIDDEN, HIDDEN // 2), (HIDDEN // 2, DE),        # fr1..3_pv
        (P + 2 * DE, HIDDEN), (HIDDEN, HIDDEN // 2), (HIDDEN // 2, DO),   # fo1..3
        (DO, N_TARGETS),                                                  # fc_fixed
    ]
    keys = jax.random.split(key, len(layer_dims))
    return [init_linear(k, fi, fo) for k, (fi, fo) in zip(keys, layer_dims)]


# ----------------------------------------------------------------------------
# Pure-JAX reference (mirrors the PyTorch forward, vv_branch=False)
# ----------------------------------------------------------------------------
def reference_forward(x, y, mats, params):
    Rr, Rs, Rk, Rv = mats
    (Wr1, br1), (Wr2, br2), (Wr3, br3), \
        (Wp1, bp1), (Wp2, bp2), (Wp3, bp3), \
        (Wo1, bo1), (Wo2, bo2), (Wo3, bo3), (Wfc, bfc) = params

    def tmul(a, m):                       # (B, A, C) x (C, D) -> (B, A, D)
        return jnp.einsum('bac,cd->bad', a, m)

    relu = jax.nn.relu

    Orr, Ors = tmul(x, Rr), tmul(x, Rs)
    B = jnp.transpose(jnp.concatenate([Orr, Ors], axis=1), (0, 2, 1))
    B = relu(B @ Wr1 + br1)
    B = relu(B @ Wr2 + br2)
    E = relu(B @ Wr3 + br3)               # (B, Nr, De)
    Ebar_pp = jnp.einsum('bed,dn->ben', jnp.transpose(E, (0, 2, 1)), Rr.T)

    Ork, Orv = tmul(x, Rk), tmul(y, Rv)
    B = jnp.transpose(jnp.concatenate([Ork, Orv], axis=1), (0, 2, 1))
    B = relu(B @ Wp1 + bp1)
    B = relu(B @ Wp2 + bp2)
    E = relu(B @ Wp3 + bp3)               # (B, Nt, De)
    Ebar_pv = jnp.einsum('bed,dn->ben', jnp.transpose(E, (0, 2, 1)), Rk.T)

    C = jnp.transpose(jnp.concatenate([x, Ebar_pp, Ebar_pv], axis=1), (0, 2, 1))
    C = relu(C @ Wo1 + bo1)
    C = relu(C @ Wo2 + bo2)
    O = relu(C @ Wo3 + bo3)               # (B, N, Do)

    Nsum = jnp.sum(O, axis=1)             # (B, Do)
    return Nsum @ Wfc + bfc               # (B, n_targets)


# ----------------------------------------------------------------------------
if __name__ == "__main__":
    key = jax.random.PRNGKey(0)
    kx, ky, kp = jax.random.split(key, 3)

    x = jax.random.normal(kx, (BATCH, P, N), jnp.float32)    # PyTorch layout
    y = jax.random.normal(ky, (BATCH, S, NV), jnp.float32)

    mats = build_adjacency()
    params = build_params(kp)
    fused_consts = build_fused_operands(mats, params, BATCH)

    out = graphnet_forward(x, y, fused_consts)
    out = jax.block_until_ready(out)

    ref = jax.block_until_ready(reference_forward(x, y, mats, params))
    np.testing.assert_allclose(np.asarray(out), np.asarray(ref),
                               rtol=1e-2, atol=1e-2)

    print("KERNEL_OK")
</pallas_src>

<mosaic_0001>
module attributes {stable_mosaic.version = 11 : i64} {
  func.func @graphnet_kernel(%arg0: memref<16x6xf32, #tpu.memory_space<vmem>>, %arg1: memref<8x4xf32, #tpu.memory_space<vmem>>, %arg2: memref<176x16xf32, #tpu.memory_space<vmem>>, %arg3: memref<176x16xf32, #tpu.memory_space<vmem>>, %arg4: memref<176x8xf32, #tpu.memory_space<vmem>>, %arg5: memref<16x176xf32, #tpu.memory_space<vmem>>, %arg6: memref<16x176xf32, #tpu.memory_space<vmem>>, %arg7: memref<2x16xf32, #tpu.memory_space<vmem>>, %arg8: memref<6x64xf32, #tpu.memory_space<vmem>>, %arg9: memref<6x64xf32, #tpu.memory_space<vmem>>, %arg10: memref<4x64xf32, #tpu.memory_space<vmem>>, %arg11: memref<1x64xf32, #tpu.memory_space<vmem>>, %arg12: memref<64x32xf32, #tpu.memory_space<vmem>>, %arg13: memref<1x32xf32, #tpu.memory_space<vmem>>, %arg14: memref<32x10xf32, #tpu.memory_space<vmem>>, %arg15: memref<1x10xf32, #tpu.memory_space<vmem>>, %arg16: memref<6x32xf32, #tpu.memory_space<vmem>>, %arg17: memref<10x32xf32, #tpu.memory_space<vmem>>, %arg18: memref<10x32xf32, #tpu.memory_space<vmem>>, %arg19: memref<1x32xf32, #tpu.memory_space<vmem>>, %arg20: memref<32x16xf32, #tpu.memory_space<vmem>>, %arg21: memref<1x16xf32, #tpu.memory_space<vmem>>, %arg22: memref<16x6xf32, #tpu.memory_space<vmem>>, %arg23: memref<1x6xf32, #tpu.memory_space<vmem>>, %arg24: memref<6x3xf32, #tpu.memory_space<vmem>>, %arg25: memref<1x3xf32, #tpu.memory_space<vmem>>, %arg26: memref<2x3xf32, #tpu.memory_space<vmem>>) attributes {dimension_semantics = [], scalar_prefetch = 0 : i64, scratch_operands = 0 : i64, tpu.core_type = #tpu.core_type<tc>} {
    %c0 = arith.constant 0 : index
    %c0_0 = arith.constant 0 : index
    %0 = vector.load %arg0[%c0, %c0_0] : memref<16x6xf32, #tpu.memory_space<vmem>>, vector<16x6xf32>
    %c0_1 = arith.constant 0 : index
    %c0_2 = arith.constant 0 : index
    %1 = vector.load %arg1[%c0_1, %c0_2] : memref<8x4xf32, #tpu.memory_space<vmem>>, vector<8x4xf32>
    %c0_3 = arith.constant 0 : index
    %c0_4 = arith.constant 0 : index
    %2 = vector.load %arg8[%c0_3, %c0_4] : memref<6x64xf32, #tpu.memory_space<vmem>>, vector<6x64xf32>
    %cst = arith.constant dense<0.000000e+00> : vector<16x64xf32>
    %3 = tpu.matmul %0, %2, %cst {dimension_numbers = #tpu.dot_dimension_numbers<[1], [0], [0], [1], [0, 0, 1, 1], [], []>} : vector<16x6xf32>, vector<6x64xf32>, vector<16x64xf32> -> vector<16x64xf32>
    %c0_5 = arith.constant 0 : index
    %c0_6 = arith.constant 0 : index
    %4 = vector.load %arg9[%c0_5, %c0_6] : memref<6x64xf32, #tpu.memory_space<vmem>>, vector<6x64xf32>
    %cst_7 = arith.constant dense<0.000000e+00> : vector<16x64xf32>
    %5 = tpu.matmul %0, %4, %cst_7 {dimension_numbers = #tpu.dot_dimension_numbers<[1], [0], [0], [1], [0, 0, 1, 1], [], []>} : vector<16x6xf32>, vector<6x64xf32>, vector<16x64xf32> -> vector<16x64xf32>
    %c0_8 = arith.constant 0 : index
    %c0_9 = arith.constant 0 : index
    %6 = vector.load %arg10[%c0_8, %c0_9] : memref<4x64xf32, #tpu.memory_space<vmem>>, vector<4x64xf32>
    %cst_10 = arith.constant dense<0.000000e+00> : vector<8x64xf32>
    %7 = tpu.matmul %1, %6, %cst_10 {dimension_numbers = #tpu.dot_dimension_numbers<[1], [0], [0], [1], [0, 0, 1, 1], [], []>} : vector<8x4xf32>, vector<4x64xf32>, vector<8x64xf32> -> vector<8x64xf32>
    %c0_11 = arith.constant 0 : index
    %c0_12 = arith.constant 0 : index
    %8 = vector.load %arg2[%c0_11, %c0_12] : memref<176x16xf32, #tpu.memory_space<vmem>>, vector<176x16xf32>
    %cst_13 = arith.constant dense<0.000000e+00> : vector<176x64xf32>
    %9 = tpu.matmul %8, %3, %cst_13 {dimension_numbers = #tpu.dot_dimension_numbers<[1], [0], [0], [1], [0, 0, 1, 1], [], []>} : vector<176x16xf32>, vector<16x64xf32>, vector<176x64xf32> -> vector<176x64xf32>
    %c0_14 = arith.constant 0 : index
    %c0_15 = arith.constant 0 : index
    %10 = vector.load %arg3[%c0_14, %c0_15] : memref<176x16xf32, #tpu.memory_space<vmem>>, vector<176x16xf32>
    %cst_16 = arith.constant dense<0.000000e+00> : vector<176x64xf32>
    %11 = tpu.matmul %10, %5, %cst_16 {dimension_numbers = #tpu.dot_dimension_numbers<[1], [0], [0], [1], [0, 0, 1, 1], [], []>} : vector<176x16xf32>, vector<16x64xf32>, vector<176x64xf32> -> vector<176x64xf32>
    %12 = arith.addf %9, %11 : vector<176x64xf32>
    %c0_17 = arith.constant 0 : index
    %c0_18 = arith.constant 0 : index
    %13 = vector.load %arg4[%c0_17, %c0_18] : memref<176x8xf32, #tpu.memory_space<vmem>>, vector<176x8xf32>
    %cst_19 = arith.constant dense<0.000000e+00> : vector<176x64xf32>
    %14 = tpu.matmul %13, %7, %cst_19 {dimension_numbers = #tpu.dot_dimension_numbers<[1], [0], [0], [1], [0, 0, 1, 1], [], []>} : vector<176x8xf32>, vector<8x64xf32>, vector<176x64xf32> -> vector<176x64xf32>
    %15 = arith.addf %12, %14 : vector<176x64xf32>
    %c0_20 = arith.constant 0 : index
    %c0_21 = arith.constant 0 : index
    %16 = vector.load %arg11[%c0_20, %c0_21] : memref<1x64xf32, #tpu.memory_space<vmem>>, vector<1x64xf32>
    %17 = vector.broadcast %16 : vector<1x64xf32> to vector<176x64xf32>
    %18 = arith.addf %15, %17 : vector<176x64xf32>
    %cst_22 = arith.constant 0.000000e+00 : f32
    %19 = vector.broadcast %cst_22 : f32 to vector<176x64xf32>
    %20 = arith.maximumf %18, %19 : vector<176x64xf32>
    %c0_23 = arith.constant 0 : index
    %c0_24 = arith.constant 0 : index
    %21 = vector.load %arg12[%c0_23, %c0_24] : memref<64x32xf32, #tpu.memory_space<vmem>>, vector<64x32xf32>
    %cst_25 = arith.constant dense<0.000000e+00> : vector<176x32xf32>
    %22 = tpu.matmul %20, %21, %cst_25 {dimension_numbers = #tpu.dot_dimension_numbers<[1], [0], [0], [1], [0, 0, 1, 1], [], []>} : vector<176x64xf32>, vector<64x32xf32>, vector<176x32xf32> -> vector<176x32xf32>
    %c0_26 = arith.constant 0 : index
    %c0_27 = arith.constant 0 : index
    %23 = vector.load %arg13[%c0_26, %c0_27] : memref<1x32xf32, #tpu.memory_space<vmem>>, vector<1x32xf32>
    %24 = vector.broadcast %23 : vector<1x32xf32> to vector<176x32xf32>
    %25 = arith.addf %22, %24 : vector<176x32xf32>
    %cst_28 = arith.constant 0.000000e+00 : f32
    %26 = vector.broadcast %cst_28 : f32 to vector<176x32xf32>
    %27 = arith.maximumf %25, %26 : vector<176x32xf32>
    %c0_29 = arith.constant 0 : index
    %c0_30 = arith.constant 0 : index
    %28 = vector.load %arg14[%c0_29, %c0_30] : memref<32x10xf32, #tpu.memory_space<vmem>>, vector<32x10xf32>
    %cst_31 = arith.constant dense<0.000000e+00> : vector<176x10xf32>
    %29 = tpu.matmul %27, %28, %cst_31 {dimension_numbers = #tpu.dot_dimension_numbers<[1], [0], [0], [1], [0, 0, 1, 1], [], []>} : vector<176x32xf32>, vector<32x10xf32>, vector<176x10xf32> -> vector<176x10xf32>
    %c0_32 = arith.constant 0 : index
    %c0_33 = arith.constant 0 : index
    %30 = vector.load %arg15[%c0_32, %c0_33] : memref<1x10xf32, #tpu.memory_space<vmem>>, vector<1x10xf32>
    %31 = vector.broadcast %30 : vector<1x10xf32> to vector<176x10xf32>
    %32 = arith.addf %29, %31 : vector<176x10xf32>
    %cst_34 = arith.constant 0.000000e+00 : f32
    %33 = vector.broadcast %cst_34 : f32 to vector<176x10xf32>
    %34 = arith.maximumf %32, %33 : vector<176x10xf32>
    %c0_35 = arith.constant 0 : index
    %c0_36 = arith.constant 0 : index
    %35 = vector.load %arg5[%c0_35, %c0_36] : memref<16x176xf32, #tpu.memory_space<vmem>>, vector<16x176xf32>
    %cst_37 = arith.constant dense<0.000000e+00> : vector<16x10xf32>
    %36 = tpu.matmul %35, %34, %cst_37 {dimension_numbers = #tpu.dot_dimension_numbers<[1], [0], [0], [1], [0, 0, 1, 1], [], []>} : vector<16x176xf32>, vector<176x10xf32>, vector<16x10xf32> -> vector<16x10xf32>
    %c0_38 = arith.constant 0 : index
    %c0_39 = arith.constant 0 : index
    %37 = vector.load %arg6[%c0_38, %c0_39] : memref<16x176xf32, #tpu.memory_space<vmem>>, vector<16x176xf32>
    %cst_40 = arith.constant dense<0.000000e+00> : vector<16x10xf32>
    %38 = tpu.matmul %37, %34, %cst_40 {dimension_numbers = #tpu.dot_dimension_numbers<[1], [0], [0], [1], [0, 0, 1, 1], [], []>} : vector<16x176xf32>, vector<176x10xf32>, vector<16x10xf32> -> vector<16x10xf32>
    %c0_41 = arith.constant 0 : index
    %c0_42 = arith.constant 0 : index
    %39 = vector.load %arg16[%c0_41, %c0_42] : memref<6x32xf32, #tpu.memory_space<vmem>>, vector<6x32xf32>
    %cst_43 = arith.constant dense<0.000000e+00> : vector<16x32xf32>
    %40 = tpu.matmul %0, %39, %cst_43 {dimension_numbers = #tpu.dot_dimension_numbers<[1], [0], [0], [1], [0, 0, 1, 1], [], []>} : vector<16x6xf32>, vector<6x32xf32>, vector<16x32xf32> -> vector<16x32xf32>
    %c0_44 = arith.constant 0 : index
    %c0_45 = arith.constant 0 : index
    %41 = vector.load %arg17[%c0_44, %c0_45] : memref<10x32xf32, #tpu.memory_space<vmem>>, vector<10x32xf32>
    %cst_46 = arith.constant dense<0.000000e+00> : vector<16x32xf32>
    %42 = tpu.matmul %36, %41, %cst_46 {dimension_numbers = #tpu.dot_dimension_numbers<[1], [0], [0], [1], [0, 0, 1, 1], [], []>} : vector<16x10xf32>, vector<10x32xf32>, vector<16x32xf32> -> vector<16x32xf32>
    %43 = arith.addf %40, %42 : vector<16x32xf32>
    %c0_47 = arith.constant 0 : index
    %c0_48 = arith.constant 0 : index
    %44 = vector.load %arg18[%c0_47, %c0_48] : memref<10x32xf32, #tpu.memory_space<vmem>>, vector<10x32xf32>
    %cst_49 = arith.constant dense<0.000000e+00> : vector<16x32xf32>
    %45 = tpu.matmul %38, %44, %cst_49 {dimension_numbers = #tpu.dot_dimension_numbers<[1], [0], [0], [1], [0, 0, 1, 1], [], []>} : vector<16x10xf32>, vector<10x32xf32>, vector<16x32xf32> -> vector<16x32xf32>
    %46 = arith.addf %43, %45 : vector<16x32xf32>
    %c0_50 = arith.constant 0 : index
    %c0_51 = arith.constant 0 : index
    %47 = vector.load %arg19[%c0_50, %c0_51] : memref<1x32xf32, #tpu.memory_space<vmem>>, vector<1x32xf32>
    %48 = vector.broadcast %47 : vector<1x32xf32> to vector<16x32xf32>
    %49 = arith.addf %46, %48 : vector<16x32xf32>
    %cst_52 = arith.constant 0.000000e+00 : f32
    %50 = vector.broadcast %cst_52 : f32 to vector<16x32xf32>
    %51 = arith.maximumf %49, %50 : vector<16x32xf32>
    %c0_53 = arith.constant 0 : index
    %c0_54 = arith.constant 0 : index
    %52 = vector.load %arg20[%c0_53, %c0_54] : memref<32x16xf32, #tpu.memory_space<vmem>>, vector<32x16xf32>
    %cst_55 = arith.constant dense<0.000000e+00> : vector<16x16xf32>
    %53 = tpu.matmul %51, %52, %cst_55 {dimension_numbers = #tpu.dot_dimension_numbers<[1], [0], [0], [1], [0, 0, 1, 1], [], []>} : vector<16x32xf32>, vector<32x16xf32>, vector<16x16xf32> -> vector<16x16xf32>
    %c0_56 = arith.constant 0 : index
    %c0_57 = arith.constant 0 : index
    %54 = vector.load %arg21[%c0_56, %c0_57] : memref<1x16xf32, #tpu.memory_space<vmem>>, vector<1x16xf32>
    %55 = vector.broadcast %54 : vector<1x16xf32> to vector<16x16xf32>
    %56 = arith.addf %53, %55 : vector<16x16xf32>
    %cst_58 = arith.constant 0.000000e+00 : f32
    %57 = vector.broadcast %cst_58 : f32 to vector<16x16xf32>
    %58 = arith.maximumf %56, %57 : vector<16x16xf32>
    %c0_59 = arith.constant 0 : index
    %c0_60 = arith.constant 0 : index
    %59 = vector.load %arg22[%c0_59, %c0_60] : memref<16x6xf32, #tpu.memory_space<vmem>>, vector<16x6xf32>
    %cst_61 = arith.constant dense<0.000000e+00> : vector<16x6xf32>
    %60 = tpu.matmul %58, %59, %cst_61 {dimension_numbers = #tpu.dot_dimension_numbers<[1], [0], [0], [1], [0, 0, 1, 1], [], []>} : vector<16x16xf32>, vector<16x6xf32>, vector<16x6xf32> -> vector<16x6xf32>
    %c0_62 = arith.constant 0 : index
    %c0_63 = arith.constant 0 : index
    %61 = vector.load %arg23[%c0_62, %c0_63] : memref<1x6xf32, #tpu.memory_space<vmem>>, vector<1x6xf32>
    %62 = vector.broadcast %61 : vector<1x6xf32> to vector<16x6xf32>
    %63 = arith.addf %60, %62 : vector<16x6xf32>
    %cst_64 = arith.constant 0.000000e+00 : f32
    %64 = vector.broadcast %cst_64 : f32 to vector<16x6xf32>
    %65 = arith.maximumf %63, %64 : vector<16x6xf32>
    %c0_65 = arith.constant 0 : index
    %c0_66 = arith.constant 0 : index
    %66 = vector.load %arg7[%c0_65, %c0_66] : memref<2x16xf32, #tpu.memory_space<vmem>>, vector<2x16xf32>
    %cst_67 = arith.constant dense<0.000000e+00> : vector<2x6xf32>
    %67 = tpu.matmul %66, %65, %cst_67 {dimension_numbers = #tpu.dot_dimension_numbers<[1], [0], [0], [1], [0, 0, 1, 1], [], []>} : vector<2x16xf32>, vector<16x6xf32>, vector<2x6xf32> -> vector<2x6xf32>
    %c0_68 = arith.constant 0 : index
    %c0_69 = arith.constant 0 : index
    %68 = vector.load %arg24[%c0_68, %c0_69] : memref<6x3xf32, #tpu.memory_space<vmem>>, vector<6x3xf32>
    %cst_70 = arith.constant dense<0.000000e+00> : vector<2x3xf32>
    %69 = tpu.matmul %67, %68, %cst_70 {dimension_numbers = #tpu.dot_dimension_numbers<[1], [0], [0], [1], [0, 0, 1, 1], [], []>} : vector<2x6xf32>, vector<6x3xf32>, vector<2x3xf32> -> vector<2x3xf32>
    %c0_71 = arith.constant 0 : index
    %c0_72 = arith.constant 0 : index
    %70 = vector.load %arg25[%c0_71, %c0_72] : memref<1x3xf32, #tpu.memory_space<vmem>>, vector<1x3xf32>
    %71 = vector.broadcast %70 : vector<1x3xf32> to vector<2x3xf32>
    %72 = arith.addf %69, %71 : vector<2x3xf32>
    %c0_73 = arith.constant 0 : index
    %c0_74 = arith.constant 0 : index
    %73 = vector.load %arg26[%c0_73, %c0_74] : memref<2x3xf32, #tpu.memory_space<vmem>>, vector<2x3xf32>
    tpu.vector_store %arg26[%c0_73, %c0_74], %72 {strides = array<i32>} : memref<2x3xf32, #tpu.memory_space<vmem>>, vector<2x3xf32>,
    return
  }
}

</mosaic_0001>

<llo_original>
// kernel: tpu_custom_call.1
$region0: #{tpu_custom_call.1}
  #allocation0 [shape = 'u32[]', space=smem, size = 0x4, offset = 0x4, fixed_abs, tag = 'smem constant byte address 0x4 - core index']
  #allocation1 [shape = 'u32[144,128]{1,0:T(1,128)}', space=vmem, size = 0x12000, scoped, tag = 'internal scratch']
  %s0 = inlined_call_operand.vmem [shape: f32[16,6], index: 0, kind: input, shape index: {}]
  %s1 = inlined_call_operand.vmem [shape: f32[8,4], index: 1, kind: input, shape index: {}]
  %s2 = inlined_call_operand.vmem [shape: f32[176,16], index: 2, kind: input, shape index: {}]
  %s3 = inlined_call_operand.vmem [shape: f32[176,16], index: 3, kind: input, shape index: {}]
  %s4 = inlined_call_operand.vmem [shape: f32[176,8], index: 4, kind: input, shape index: {}]
  %s5 = inlined_call_operand.vmem [shape: f32[16,176], index: 5, kind: input, shape index: {}]
  %s6 = inlined_call_operand.vmem [shape: f32[16,176], index: 6, kind: input, shape index: {}]
  %s7 = inlined_call_operand.vmem [shape: f32[2,16], index: 7, kind: input, shape index: {}]
  %s8 = inlined_call_operand.vmem [shape: f32[6,64], index: 8, kind: input, shape index: {}]
  %s9 = inlined_call_operand.vmem [shape: f32[6,64], index: 9, kind: input, shape index: {}]
  %s10 = inlined_call_operand.vmem [shape: f32[4,64], index: 10, kind: input, shape index: {}]
  %s11 = inlined_call_operand.vmem [shape: f32[1,64], index: 11, kind: input, shape index: {}]
  %s12 = inlined_call_operand.vmem [shape: f32[64,32], index: 12, kind: input, shape index: {}]
  %s13 = inlined_call_operand.vmem [shape: f32[1,32], index: 13, kind: input, shape index: {}]
  %s14 = inlined_call_operand.vmem [shape: f32[32,10], index: 14, kind: input, shape index: {}]
  %s15 = inlined_call_operand.vmem [shape: f32[1,10], index: 15, kind: input, shape index: {}]
  %s16 = inlined_call_operand.vmem [shape: f32[6,32], index: 16, kind: input, shape index: {}]
  %s17 = inlined_call_operand.vmem [shape: f32[10,32], index: 17, kind: input, shape index: {}]
  %s18 = inlined_call_operand.vmem [shape: f32[10,32], index: 18, kind: input, shape index: {}]
  %s19 = inlined_call_operand.vmem [shape: f32[1,32], index: 19, kind: input, shape index: {}]
  %s20 = inlined_call_operand.vmem [shape: f32[32,16], index: 20, kind: input, shape index: {}]
  %s21 = inlined_call_operand.vmem [shape: f32[1,16], index: 21, kind: input, shape index: {}]
  %s22 = inlined_call_operand.vmem [shape: f32[16,6], index: 22, kind: input, shape index: {}]
  %s23 = inlined_call_operand.vmem [shape: f32[1,6], index: 23, kind: input, shape index: {}]
  %s24 = inlined_call_operand.vmem [shape: f32[6,3], index: 24, kind: input, shape index: {}]
  %s25 = inlined_call_operand.vmem [shape: f32[1,3], index: 25, kind: input, shape index: {}]
  %s26 = inlined_call_operand.hbm [shape: f32[2,3], index: 26, kind: output, shape index: {}]
  %s27 = sld [smem:[#allocation0]]
  $region114: #{tpu_custom_call.1} parent=0
    _
  %s29 = ssub.s32 1, %s27
  %s30 = scalar_select 0, %s29, %s27
  $region1: #{tpu_custom_call.1} parent=0
    #allocation2 [shape = 'u8[1024]{0}', space=vmem, size = 0x400, scoped, tag = 'output window, operand 0, single buffered']
    #allocation3 [shape = 's32[1]{0}', space=sflag, size = 0x4, scoped, tag = 'scoped memory for tpu_custom_call.1']
    %31 = vsyncpa [#allocation3], 0
    // Predicated region
    $region2: #{tpu_custom_call.1} parent=1 // pred_check
      _
    $region3: #{tpu_custom_call.1} parent=1 // pred_check_branch
      %33 = sbr.rel (0) target = $region5
    $region4: #{tpu_custom_call.1} parent=1 // pred_region
      _
    $region5: #{tpu_custom_call.1} parent=1 // pred_fallthru
      _
    // Predicated region
    $region6: #{tpu_custom_call.1} parent=1 // pred_check
      _
    $region7: #{tpu_custom_call.1} parent=1 // pred_check_branch
      %35 = sbr.rel (0) target = $region9
    $region8: #{tpu_custom_call.1} parent=1 // pred_region
      _
    $region9: #{tpu_custom_call.1} parent=1 // pred_fallthru
      _
    // Predicated region
    $region10: #{tpu_custom_call.1} parent=1 // pred_check
      _
    $region11: #{tpu_custom_call.1} parent=1 // pred_check_branch
      %37 = sbr.rel (0) target = $region13
    $region12: #{tpu_custom_call.1} parent=1 // pred_region
      _
    $region13: #{tpu_custom_call.1} parent=1 // pred_fallthru
      _
    // Predicated region
    $region14: #{tpu_custom_call.1} parent=1 // pred_check
      _
    $region15: #{tpu_custom_call.1} parent=1 // pred_check_branch
      %39 = sbr.rel (0) target = $region17
    $region16: #{tpu_custom_call.1} parent=1 // pred_region
      _
    $region17: #{tpu_custom_call.1} parent=1 // pred_fallthru
      _
    // Predicated region
    $region18: #{tpu_custom_call.1} parent=1 // pred_check
      _
    $region19: #{tpu_custom_call.1} parent=1 // pred_check_branch
      %41 = sbr.rel (0) target = $region21
    $region20: #{tpu_custom_call.1} parent=1 // pred_region
      _
    $region21: #{tpu_custom_call.1} parent=1 // pred_fallthru
      _
    // Predicated region
    $region22: #{tpu_custom_call.1} parent=1 // pred_check
      _
    $region23: #{tpu_custom_call.1} parent=1 // pred_check_branch
      %43 = sbr.rel (0) target = $region25
    $region24: #{tpu_custom_call.1} parent=1 // pred_region
      _
    $region25: #{tpu_custom_call.1} parent=1 // pred_fallthru
      _
    // Predicated region
    $region26: #{tpu_custom_call.1} parent=1 // pred_check
      _
    $region27: #{tpu_custom_call.1} parent=1 // pred_check_branch
      %45 = sbr.rel (0) target = $region29
    $region28: #{tpu_custom_call.1} parent=1 // pred_region
      _
    $region29: #{tpu_custom_call.1} parent=1 // pred_fallthru
      _
    // Predicated region
    $region30: #{tpu_custom_call.1} parent=1 // pred_check
      _
    $region31: #{tpu_custom_call.1} parent=1 // pred_check_branch
      %47 = sbr.rel (0) target = $region33
    $region32: #{tpu_custom_call.1} parent=1 // pred_region
      _
    $region33: #{tpu_custom_call.1} parent=1 // pred_fallthru
      _
    // Predicated region
    $region34: #{tpu_custom_call.1} parent=1 // pred_check
      _
    $region35: #{tpu_custom_call.1} parent=1 // pred_check_branch
      %49 = sbr.rel (0) target = $region37
    $region36: #{tpu_custom_call.1} parent=1 // pred_region
      _
    $region37: #{tpu_custom_call.1} parent=1 // pred_fallthru
      _
    // Predicated region
    $region38: #{tpu_custom_call.1} parent=1 // pred_check
      _
    $region39: #{tpu_custom_call.1} parent=1 // pred_check_branch
      %51 = sbr.rel (0) target = $region41
    $region40: #{tpu_custom_call.1} parent=1 // pred_region
      _
    $region41: #{tpu_custom_call.1} parent=1 // pred_fallthru
      _
    // Predicated region
    $region42: #{tpu_custom_call.1} parent=1 // pred_check
      _
    $region43: #{tpu_custom_call.1} parent=1 // pred_check_branch
      %53 = sbr.rel (0) target = $region45
    $region44: #{tpu_custom_call.1} parent=1 // pred_region
      _
    $region45: #{tpu_custom_call.1} parent=1 // pred_fallthru
      _
    // Predicated region
    $region46: #{tpu_custom_call.1} parent=1 // pred_check
      _
    $region47: #{tpu_custom_call.1} parent=1 // pred_check_branch
      %55 = sbr.rel (0) target = $region49
    $region48: #{tpu_custom_call.1} parent=1 // pred_region
      _
    $region49: #{tpu_custom_call.1} parent=1 // pred_fallthru
      _
    // Predicated region
    $region50: #{tpu_custom_call.1} parent=1 // pred_check
      _
    $region51: #{tpu_custom_call.1} parent=1 // pred_check_branch
      %57 = sbr.rel (0) target = $region53
    $region52: #{tpu_custom_call.1} parent=1 // pred_region
      _
    $region53: #{tpu_custom_call.1} parent=1 // pred_fallthru
      _
    // Predicated region
    $region54: #{tpu_custom_call.1} parent=1 // pred_check
      _
    $region55: #{tpu_custom_call.1} parent=1 // pred_check_branch
      %59 = sbr.rel (0) target = $region57
    $region56: #{tpu_custom_call.1} parent=1 // pred_region
      _
    $region57: #{tpu_custom_call.1} parent=1 // pred_fallthru
      _
    // Predicated region
    $region58: #{tpu_custom_call.1} parent=1 // pred_check
      _
    $region59: #{tpu_custom_call.1} parent=1 // pred_check_branch
      %61 = sbr.rel (0) target = $region61
    $region60: #{tpu_custom_call.1} parent=1 // pred_region
      _
    $region61: #{tpu_custom_call.1} parent=1 // pred_fallthru
      _
    // Predicated region
    $region62: #{tpu_custom_call.1} parent=1 // pred_check
      _
    $region63: #{tpu_custom_call.1} parent=1 // pred_check_branch
      %63 = sbr.rel (0) target = $region65
    $region64: #{tpu_custom_call.1} parent=1 // pred_region
      _
    $region65: #{tpu_custom_call.1} parent=1 // pred_fallthru
      _
    // Predicated region
    $region66: #{tpu_custom_call.1} parent=1 // pred_check
      _
    $region67: #{tpu_custom_call.1} parent=1 // pred_check_branch
      %65 = sbr.rel (0) target = $region69
    $region68: #{tpu_custom_call.1} parent=1 // pred_region
      _
    $region69: #{tpu_custom_call.1} parent=1 // pred_fallthru
      _
    // Predicated region
    $region70: #{tpu_custom_call.1} parent=1 // pred_check
      _
    $region71: #{tpu_custom_call.1} parent=1 // pred_check_branch
      %67 = sbr.rel (0) target = $region73
    $region72: #{tpu_custom_call.1} parent=1 // pred_region
      _
    $region73: #{tpu_custom_call.1} parent=1 // pred_fallthru
      _
    // Predicated region
    $region74: #{tpu_custom_call.1} parent=1 // pred_check
      _
    $region75: #{tpu_custom_call.1} parent=1 // pred_check_branch
      %69 = sbr.rel (0) target = $region77
    $region76: #{tpu_custom_call.1} parent=1 // pred_region
      _
    $region77: #{tpu_custom_call.1} parent=1 // pred_fallthru
      _
    // Predicated region
    $region78: #{tpu_custom_call.1} parent=1 // pred_check
      _
    $region79: #{tpu_custom_call.1} parent=1 // pred_check_branch
      %71 = sbr.rel (0) target = $region81
    $region80: #{tpu_custom_call.1} parent=1 // pred_region
      _
    $region81: #{tpu_custom_call.1} parent=1 // pred_fallthru
      _
    // Predicated region
    $region82: #{tpu_custom_call.1} parent=1 // pred_check
      _
    $region83: #{tpu_custom_call.1} parent=1 // pred_check_branch
      %73 = sbr.rel (0) target = $region85
    $region84: #{tpu_custom_call.1} parent=1 // pred_region
      _
    $region85: #{tpu_custom_call.1} parent=1 // pred_fallthru
      _
    // Predicated region
    $region86: #{tpu_custom_call.1} parent=1 // pred_check
      _
    $region87: #{tpu_custom_call.1} parent=1 // pred_check_branch
      %75 = sbr.rel (0) target = $region89
    $region88: #{tpu_custom_call.1} parent=1 // pred_region
      _
    $region89: #{tpu_custom_call.1} parent=1 // pred_fallthru
      _
    // Predicated region
    $region90: #{tpu_custom_call.1} parent=1 // pred_check
      _
    $region91: #{tpu_custom_call.1} parent=1 // pred_check_branch
      %77 = sbr.rel (0) target = $region93
    $region92: #{tpu_custom_call.1} parent=1 // pred_region
      _
    $region93: #{tpu_custom_call.1} parent=1 // pred_fallthru
      _
    // Predicated region
    $region94: #{tpu_custom_call.1} parent=1 // pred_check
      _
    $region95: #{tpu_custom_call.1} parent=1 // pred_check_branch
      %79 = sbr.rel (0) target = $region97
    $region96: #{tpu_custom_call.1} parent=1 // pred_region
      _
    $region97: #{tpu_custom_call.1} parent=1 // pred_fallthru
      _
    // Predicated region
    $region98: #{tpu_custom_call.1} parent=1 // pred_check
      _
    $region99: #{tpu_custom_call.1} parent=1 // pred_check_branch
      %81 = sbr.rel (0) target = $region101
    $region100: #{tpu_custom_call.1} parent=1 // pred_region
      _
    $region101: #{tpu_custom_call.1} parent=1 // pred_fallthru
      _
    // Predicated region
    $region102: #{tpu_custom_call.1} parent=1 // pred_check
      _
    $region103: #{tpu_custom_call.1} parent=1 // pred_check_branch
      %83 = sbr.rel (0) target = $region105
    $region104: #{tpu_custom_call.1} parent=1 // pred_region
      _
    $region105: #{tpu_custom_call.1} parent=1 // pred_fallthru
      _
    %v84 = vld [vmem:[%s0] sm:$0xff]
    %v85 = vld [vmem:[%s0 + $0x8] sm:$0xff]
    %v86 = vld [vmem:[%s1] sm:$0xff]
    %v87 = vld [vmem:[%s8] sm:$0x3f]
    %vm88 = vcmask 48128
    %v90 = vsel %vm88, %v84, 0
    %v93 = vsel %vm88, %v85, 0
    %vm95 = vcmask 1045504
    %v97 = vsel %vm95, %v87, 0
    %99 = vmatprep.subr.mxu0 0.0
    %100 = vmatpush1.msra.mxu0 %v97
    %101 = vmatprep.subr.mxu0 0.0
    %102 = vmatpush1.msra.mxu0 0.0
    %103 = vmatprep.subr.mxu0 0.0
    %104 = vmatpush1.msra.mxu0 0.0
    %105 = vmatprep.subr.mxu0 0.0
    %106 = vmatpush1.msra.mxu0 0.0
    %107 = vmatprep.subr.mxu0 0.0
    %108 = vmatpush1.msra.mxu0 0.0
    %109 = vmatprep.subr.mxu0 0.0
    %110 = vmatpush1.msra.mxu0 0.0
    %111 = vmatprep.subr.mxu0 0.0
    %112 = vmatpush1.msra.mxu0 0.0
    %113 = vmatprep.subr.mxu0 0.0
    %114 = vmatpush1.msra.mxu0 0.0
    %115 = vmatprep.subr.mxu0 0.0
    %116 = vmatpush1.msra.mxu0 0.0
    %117 = vmatprep.subr.mxu0 0.0
    %118 = vmatpush1.msra.mxu0 0.0
    %119 = vmatprep.subr.mxu0 0.0
    %120 = vmatpush1.msra.mxu0 0.0
    %121 = vmatprep.subr.mxu0 0.0
    %122 = vmatpush1.msra.mxu0 0.0
    %123 = vmatprep.subr.mxu0 0.0
    %124 = vmatpush1.msra.mxu0 0.0
    %125 = vmatprep.subr.mxu0 0.0
    %126 = vmatpush1.msra.mxu0 0.0
    %127 = vmatprep.subr.mxu0 0.0
    %128 = vmatpush1.msra.mxu0 0.0
    %129 = vmatprep.subr.mxu0 0.0
    %130 = vmatpush1.msra.mxu0 0.0
    %131 = vmatprep.subr.mxu0 0.0
    %132 = vmatpush1.msra.mxu0 0.0
    %133 = vmatprep.subr.mxu0 0.0
    %134 = vmatpush1.msra.mxu0 0.0
    %135 = vmatprep.subr.mxu0 0.0
    %136 = vmatpush1.msra.mxu0 0.0
    %137 = vmatprep.subr.mxu0 0.0
    %138 = vmatpush1.msra.mxu0 0.0
    %139 = vmatprep.subr.mxu0 0.0
    %140 = vmatpush1.msra.mxu0 0.0
    %141 = vmatprep.subr.mxu0 0.0
    %142 = vmatpush1.msra.mxu0 0.0
    %143 = vmatprep.subr.mxu0 0.0
    %144 = vmatpush1.msra.mxu0 0.0
    %145 = vmatprep.subr.mxu0 0.0
    %146 = vmatpush1.msra.mxu0 0.0
    %147 = vmatprep.subr.mxu0 0.0
    %148 = vmatpush1.msra.mxu0 0.0
    %149 = vmatprep.subr.mxu0 0.0
    %150 = vmatpush1.msra.mxu0 0.0
    %151 = vmatprep.subr.mxu0 0.0
    %152 = vmatpush1.msra.mxu0 0.0
    %153 = vmatprep.subr.mxu0 0.0
    %154 = vmatpush1.msra.mxu0 0.0
    %155 = vmatprep.subr.mxu0 0.0
    %156 = vmatpush1.msra.mxu0 0.0
    %157 = vmatprep.subr.mxu0 0.0
    %158 = vmatpush1.msra.mxu0 0.0
    %159 = vmatprep.subr.mxu0 0.0
    %160 = vmatpush1.msra.mxu0 0.0
    %161 = vmatprep.subr.mxu0 0.0
    %162 = vmatpush1.msra.mxu0 0.0
    %163 = vmatprep.mubr.f32.mxu0 0.0
    %164 = vmatmul.mubr.f32.gmra.mrb[0].mxu0 %v90
    %v165 = vpop.f32.mrb[0].mxu0
    %v166 = vadd.f32 0.0, %v165
    %v167 = vpop.f32.mrb[0].mxu0
    %168 = vmatprep.mubr.f32.mxu0 0.0
    %169 = vmatmul.mubr.f32.gmra.mrb[0].mxu0 %v93
    %v170 = vpop.f32.mrb[0].mxu0
    %v171 = vadd.f32 0.0, %v170
    %v172 = vpop.f32.mrb[0].mxu0
    %173 = vdwg.mxu0
    %v174 = vld [vmem:[%s9] sm:$0x3f]
    %v176 = vsel %vm95, %v174, 0
    %178 = vmatprep.subr.mxu0 0.0
    %179 = vmatpush1.msra.mxu0 %v176
    %180 = vmatprep.subr.mxu0 0.0
    %181 = vmatpush1.msra.mxu0 0.0
    %182 = vmatprep.subr.mxu0 0.0
    %183 = vmatpush1.msra.mxu0 0.0
    %184 = vmatprep.subr.mxu0 0.0
    %185 = vmatpush1.msra.mxu0 0.0
    %186 = vmatprep.subr.mxu0 0.0
    %187 = vmatpush1.msra.mxu0 0.0
    %188 = vmatprep.subr.mxu0 0.0
    %189 = vmatpush1.msra.mxu0 0.0
    %190 = vmatprep.subr.mxu0 0.0
    %191 = vmatpush1.msra.mxu0 0.0
    %192 = vmatprep.subr.mxu0 0.0
    %193 = vmatpush1.msra.mxu0 0.0
    %194 = vmatprep.subr.mxu0 0.0
    %195 = vmatpush1.msra.mxu0 0.0
    %196 = vmatprep.subr.mxu0 0.0
    %197 = vmatpush1.msra.mxu0 0.0
    %198 = vmatprep.subr.mxu0 0.0
    %199 = vmatpush1.msra.mxu0 0.0
    %200 = vmatprep.subr.mxu0 0.0
    %201 = vmatpush1.msra.mxu0 0.0
    %202 = vmatprep.subr.mxu0 0.0
    %203 = vmatpush1.msra.mxu0 0.0
    %204 = vmatprep.subr.mxu0 0.0
    %205 = vmatpush1.msra.mxu0 0.0
    %206 = vmatprep.subr.mxu0 0.0
    %207 = vmatpush1.msra.mxu0 0.0
    %208 = vmatprep.subr.mxu0 0.0
    %209 = vmatpush1.msra.mxu0 0.0
    %210 = vmatprep.subr.mxu0 0.0
    %211 = vmatpush1.msra.mxu0 0.0
    %212 = vmatprep.subr.mxu0 0.0
    %213 = vmatpush1.msra.mxu0 0.0
    %214 = vmatprep.subr.mxu0 0.0
    %215 = vmatpush1.msra.mxu0 0.0
    %216 = vmatprep.subr.mxu0 0.0
    %217 = vmatpush1.msra.mxu0 0.0
    %218 = vmatprep.subr.mxu0 0.0
    %219 = vmatpush1.msra.mxu0 0.0
    %220 = vmatprep.subr.mxu0 0.0
    %221 = vmatpush1.msra.mxu0 0.0
    %222 = vmatprep.subr.mxu0 0.0
    %223 = vmatpush1.msra.mxu0 0.0
    %224 = vmatprep.subr.mxu0 0.0
    %225 = vmatpush1.msra.mxu0 0.0
    %226 = vmatprep.subr.mxu0 0.0
    %227 = vmatpush1.msra.mxu0 0.0
    %228 = vmatprep.subr.mxu0 0.0
    %229 = vmatpush1.msra.mxu0 0.0
    %230 = vmatprep.subr.mxu0 0.0
    %231 = vmatpush1.msra.mxu0 0.0
    %232 = vmatprep.subr.mxu0 0.0
    %233 = vmatpush1.msra.mxu0 0.0
    %234 = vmatprep.subr.mxu0 0.0
    %235 = vmatpush1.msra.mxu0 0.0
    %236 = vmatprep.subr.mxu0 0.0
    %237 = vmatpush1.msra.mxu0 0.0
    %238 = vmatprep.subr.mxu0 0.0
    %239 = vmatpush1.msra.mxu0 0.0
    %240 = vmatprep.subr.mxu0 0.0
    %241 = vmatpush1.msra.mxu0 0.0
    %242 = vmatprep.mubr.f32.mxu0 0.0
    %243 = vmatmul.mubr.f32.gmra.mrb[0].mxu0 %v90
    %v244 = vpop.f32.mrb[0].mxu0
    %v245 = vadd.f32 0.0, %v244
    %v246 = vpop.f32.mrb[0].mxu0
    %247 = vmatprep.mubr.f32.mxu0 0.0
    %248 = vmatmul.mubr.f32.gmra.mrb[0].mxu0 %v93
    %v249 = vpop.f32.mrb[0].mxu0
    %v250 = vadd.f32 0.0, %v249
    %v251 = vpop.f32.mrb[0].mxu0
    %252 = vdwg.mxu0
    %v253 = vld [vmem:[%s10] sm:$0xf]
    %vm254 = vcmask 31744
    %v256 = vsel %vm254, %v86, 0
    %vm258 = vcmask 1043456
    %v260 = vsel %vm258, %v253, 0
    %262 = vmatprep.subr.mxu0 0.0
    %263 = vmatpush1.msra.mxu0 %v260
    %264 = vmatprep.subr.mxu0 0.0
    %265 = vmatpush1.msra.mxu0 0.0
    %266 = vmatprep.subr.mxu0 0.0
    %267 = vmatpush1.msra.mxu0 0.0
    %268 = vmatprep.subr.mxu0 0.0
    %269 = vmatpush1.msra.mxu0 0.0
    %270 = vmatprep.subr.mxu0 0.0
    %271 = vmatpush1.msra.mxu0 0.0
    %272 = vmatprep.subr.mxu0 0.0
    %273 = vmatpush1.msra.mxu0 0.0
    %274 = vmatprep.subr.mxu0 0.0
    %275 = vmatpush1.msra.mxu0 0.0
    %276 = vmatprep.subr.mxu0 0.0
    %277 = vmatpush1.msra.mxu0 0.0
    %278 = vmatprep.subr.mxu0 0.0
    %279 = vmatpush1.msra.mxu0 0.0
    %280 = vmatprep.subr.mxu0 0.0
    %281 = vmatpush1.msra.mxu0 0.0
    %282 = vmatprep.subr.mxu0 0.0
    %283 = vmatpush1.msra.mxu0 0.0
    %284 = vmatprep.subr.mxu0 0.0
    %285 = vmatpush1.msra.mxu0 0.0
    %286 = vmatprep.subr.mxu0 0.0
    %287 = vmatpush1.msra.mxu0 0.0
    %288 = vmatprep.subr.mxu0 0.0
    %289 = vmatpush1.msra.mxu0 0.0
    %290 = vmatprep.subr.mxu0 0.0
    %291 = vmatpush1.msra.mxu0 0.0
    %292 = vmatprep.subr.mxu0 0.0
    %293 = vmatpush1.msra.mxu0 0.0
    %294 = vmatprep.subr.mxu0 0.0
    %295 = vmatpush1.msra.mxu0 0.0
    %296 = vmatprep.subr.mxu0 0.0
    %297 = vmatpush1.msra.mxu0 0.0
    %298 = vmatprep.subr.mxu0 0.0
    %299 = vmatpush1.msra.mxu0 0.0
    %300 = vmatprep.subr.mxu0 0.0
    %301 = vmatpush1.msra.mxu0 0.0
    %302 = vmatprep.subr.mxu0 0.0
    %303 = vmatpush1.msra.mxu0 0.0
    %304 = vmatprep.subr.mxu0 0.0
    %305 = vmatpush1.msra.mxu0 0.0
    %306 = vmatprep.subr.mxu0 0.0
    %307 = vmatpush1.msra.mxu0 0.0
    %308 = vmatprep.subr.mxu0 0.0
    %309 = vmatpush1.msra.mxu0 0.0
    %310 = vmatprep.subr.mxu0 0.0
    %311 = vmatpush1.msra.mxu0 0.0
    %312 = vmatprep.subr.mxu0 0.0
    %313 = vmatpush1.msra.mxu0 0.0
    %314 = vmatprep.subr.mxu0 0.0
    %315 = vmatpush1.msra.mxu0 0.0
    %316 = vmatprep.subr.mxu0 0.0
    %317 = vmatpush1.msra.mxu0 0.0
    %318 = vmatprep.subr.mxu0 0.0
    %319 = vmatpush1.msra.mxu0 0.0
    %320 = vmatprep.subr.mxu0 0.0
    %321 = vmatpush1.msra.mxu0 0.0
    %322 = vmatprep.subr.mxu0 0.0
    %323 = vmatpush1.msra.mxu0 0.0
    %324 = vmatprep.subr.mxu0 0.0
    %325 = vmatpush1.msra.mxu0 0.0
    %326 = vmatprep.mubr.f32.mxu0 0.0
    %327 = vmatmul.mubr.f32.gmra.mrb[0].mxu0 %v256
    %v328 = vpop.f32.mrb[0].mxu0
    %v329 = vadd.f32 0.0, %v328
    %v330 = vpop.f32.mrb[0].mxu0
    %331 = vdwg.mxu0
    %v332 = vld [vmem:[%s2] sm:$0xff]
    %v333 = vld [vmem:[%s2 + $0x8] sm:$0xff]
    %v334 = vld [vmem:[%s2 + $0x10] sm:$0xff]
    %v335 = vld [vmem:[%s2 + $0x18] sm:$0xff]
    %v336 = vld [vmem:[%s2 + $0x20] sm:$0xff]
    %v337 = vld [vmem:[%s2 + $0x28] sm:$0xff]
    %v338 = vld [vmem:[%s2 + $0x30] sm:$0xff]
    %v339 = vld [vmem:[%s2 + $0x38] sm:$0xff]
    %v340 = vld [vmem:[%s2 + $0x40] sm:$0xff]
    %v341 = vld [vmem:[%s2 + $0x48] sm:$0xff]
    %v342 = vld [vmem:[%s2 + $0x50] sm:$0xff]
    %v343 = vld [vmem:[%s2 + $0x58] sm:$0xff]
    %v344 = vld [vmem:[%s2 + $0x60] sm:$0xff]
    %v345 = vld [vmem:[%s2 + $0x68] sm:$0xff]
    %v346 = vld [vmem:[%s2 + $0x70] sm:$0xff]
    %v347 = vld [vmem:[%s2 + $0x78] sm:$0xff]
    %v348 = vld [vmem:[%s2 + $0x80] sm:$0xff]
    %v349 = vld [vmem:[%s2 + $0x88] sm:$0xff]
    %v350 = vld [vmem:[%s2 + $0x90] sm:$0xff]
    %v351 = vld [vmem:[%s2 + $0x98] sm:$0xff]
    %v352 = vld [vmem:[%s2 + $0xa0] sm:$0xff]
    %v353 = vld [vmem:[%s2 + $0xa8] sm:$0xff]
    %v354 = vld [vmem:[%s3] sm:$0xff]
    %v355 = vld [vmem:[%s3 + $0x8] sm:$0xff]
    %v356 = vld [vmem:[%s3 + $0x10] sm:$0xff]
    %v357 = vld [vmem:[%s3 + $0x18] sm:$0xff]
    %v358 = vld [vmem:[%s3 + $0x20] sm:$0xff]
    %v359 = vld [vmem:[%s3 + $0x28] sm:$0xff]
    %v360 = vld [vmem:[%s3 + $0x30] sm:$0xff]
    %v361 = vld [vmem:[%s3 + $0x38] sm:$0xff]
    %v362 = vld [vmem:[%s3 + $0x40] sm:$0xff]
    %v363 = vld [vmem:[%s3 + $0x48] sm:$0xff]
    %v364 = vld [vmem:[%s3 + $0x50] sm:$0xff]
    %v365 = vld [vmem:[%s3 + $0x58] sm:$0xff]
    %v366 = vld [vmem:[%s3 + $0x60] sm:$0xff]
    %v367 = vld [vmem:[%s3 + $0x68] sm:$0xff]
    %v368 = vld [vmem:[%s3 + $0x70] sm:$0xff]
    %v369 = vld [vmem:[%s3 + $0x78] sm:$0xff]
    %v370 = vld [vmem:[%s3 + $0x80] sm:$0xff]
    %v371 = vld [vmem:[%s3 + $0x88] sm:$0xff]
    %v372 = vld [vmem:[%s3 + $0x90] sm:$0xff]
    %v373 = vld [vmem:[%s3 + $0x98] sm:$0xff]
    %v374 = vld [vmem:[%s3 + $0xa0] sm:$0xff]
    %v375 = vld [vmem:[%s3 + $0xa8] sm:$0xff]
    %vm376 = vcmask 130048
    %v378 = vsel %vm376, %v354, 0
    %v381 = vsel %vm376, %v355, 0
    %v384 = vsel %vm376, %v356, 0
    %v387 = vsel %vm376, %v357, 0
    %v390 = vsel %vm376, %v358, 0
    %v393 = vsel %vm376, %v359, 0
    %v396 = vsel %vm376, %v360, 0
    %v399 = vsel %vm376, %v361, 0
    %v402 = vsel %vm376, %v362, 0
    %v405 = vsel %vm376, %v363, 0
    %v408 = vsel %vm376, %v364, 0
    %v411 = vsel %vm376, %v365, 0
    %v414 = vsel %vm376, %v366, 0
    %v417 = vsel %vm376, %v367, 0
    %v420 = vsel %vm376, %v368, 0
    %v423 = vsel %vm376, %v369, 0
    %v426 = vsel %vm376, %v370, 0
    %v429 = vsel %vm376, %v371, 0
    %v432 = vsel %vm376, %v372, 0
    %v435 = vsel %vm376, %v373, 0
    %v438 = vsel %vm376, %v374, 0
    %v441 = vsel %vm376, %v375, 0
    %443 = vmatprep.subr.mxu0 0.0
    %444 = vmatpush1.msra.mxu0 %v245
    %445 = vmatprep.subr.mxu0 0.0
    %446 = vmatpush1.msra.mxu0 %v250
    %447 = vmatprep.subr.mxu0 0.0
    %448 = vmatpush1.msra.mxu0 0.0
    %449 = vmatprep.subr.mxu0 0.0
    %450 = vmatpush1.msra.mxu0 0.0
    %451 = vmatprep.subr.mxu0 0.0
    %452 = vmatpush1.msra.mxu0 0.0
    %453 = vmatprep.subr.mxu0 0.0
    %454 = vmatpush1.msra.mxu0 0.0
    %455 = vmatprep.subr.mxu0 0.0
    %456 = vmatpush1.msra.mxu0 0.0
    %457 = vmatprep.subr.mxu0 0.0
    %458 = vmatpush1.msra.mxu0 0.0
    %459 = vmatprep.subr.mxu0 0.0
    %460 = vmatpush1.msra.mxu0 0.0
    %461 = vmatprep.subr.mxu0 0.0
    %462 = vmatpush1.msra.mxu0 0.0
    %463 = vmatprep.subr.mxu0 0.0
    %464 = vmatpush1.msra.mxu0 0.0
    %465 = vmatprep.subr.mxu0 0.0
    %466 = vmatpush1.msra.mxu0 0.0
    %467 = vmatprep.subr.mxu0 0.0
    %468 = vmatpush1.msra.mxu0 0.0
    %469 = vmatprep.subr.mxu0 0.0
    %470 = vmatpush1.msra.mxu0 0.0
    %471 = vmatprep.subr.mxu0 0.0
    %472 = vmatpush1.msra.mxu0 0.0
    %473 = vmatprep.subr.mxu0 0.0
    %474 = vmatpush1.msra.mxu0 0.0
    %475 = vmatprep.subr.mxu0 0.0
    %476 = vmatpush1.msra.mxu0 0.0
    %477 = vmatprep.subr.mxu0 0.0
    %478 = vmatpush1.msra.mxu0 0.0
    %479 = vmatprep.subr.mxu0 0.0
    %480 = vmatpush1.msra.mxu0 0.0
    %481 = vmatprep.subr.mxu0 0.0
    %482 = vmatpush1.msra.mxu0 0.0
    %483 = vmatprep.subr.mxu0 0.0
    %484 = vmatpush1.msra.mxu0 0.0
    %485 = vmatprep.subr.mxu0 0.0
    %486 = vmatpush1.msra.mxu0 0.0
    %487 = vmatprep.subr.mxu0 0.0
    %488 = vmatpush1.msra.mxu0 0.0
    %489 = vmatprep.subr.mxu0 0.0
    %490 = vmatpush1.msra.mxu0 0.0
    %491 = vmatprep.subr.mxu0 0.0
    %492 = vmatpush1.msra.mxu0 0.0
    %493 = vmatprep.subr.mxu0 0.0
    %494 = vmatpush1.msra.mxu0 0.0
    %495 = vmatprep.subr.mxu0 0.0
    %496 = vmatpush1.msra.mxu0 0.0
    %497 = vmatprep.subr.mxu0 0.0
    %498 = vmatpush1.msra.mxu0 0.0
    %499 = vmatprep.subr.mxu0 0.0
    %500 = vmatpush1.msra.mxu0 0.0
    %501 = vmatprep.subr.mxu0 0.0
    %502 = vmatpush1.msra.mxu0 0.0
    %503 = vmatprep.subr.mxu0 0.0
    %504 = vmatpush1.msra.mxu0 0.0
    %505 = vmatprep.subr.mxu0 0.0
    %506 = vmatpush1.msra.mxu0 0.0
    %507 = vmatprep.mubr.f32.mxu0 0.0
    %508 = vmatmul.mubr.f32.gmra.mrb[0].mxu0 %v378
    %v509 = vpop.f32.mrb[0].mxu0
    %v510 = vadd.f32 0.0, %v509
    %v511 = vpop.f32.mrb[0].mxu0
    %512 = vmatprep.mubr.f32.mxu0 0.0
    %513 = vmatmul.mubr.f32.gmra.mrb[0].mxu0 %v381
    %v514 = vpop.f32.mrb[0].mxu0
    %v515 = vadd.f32 0.0, %v514
    %v516 = vpop.f32.mrb[0].mxu0
    %517 = vmatprep.mubr.f32.mxu0 0.0
    %518 = vmatmul.mubr.f32.gmra.mrb[0].mxu0 %v384
    %v519 = vpop.f32.mrb[0].mxu0
    %v520 = vadd.f32 0.0, %v519
    %v521 = vpop.f32.mrb[0].mxu0
    %522 = vmatprep.mubr.f32.mxu0 0.0
    %523 = vmatmul.mubr.f32.gmra.mrb[0].mxu0 %v387
    %v524 = vpop.f32.mrb[0].mxu0
    %v525 = vadd.f32 0.0, %v524
    %v526 = vpop.f32.mrb[0].mxu0
    %527 = vmatprep.mubr.f32.mxu0 0.0
    %528 = vmatmul.mubr.f32.gmra.mrb[0].mxu0 %v390
    %v529 = vpop.f32.mrb[0].mxu0
    %v530 = vadd.f32 0.0, %v529
    %v531 = vpop.f32.mrb[0].mxu0
    %532 = vmatprep.mubr.f32.mxu0 0.0
    %533 = vmatmul.mubr.f32.gmra.mrb[0].mxu0 %v393
    %v534 = vpop.f32.mrb[0].mxu0
    %v535 = vadd.f32 0.0, %v534
    %v536 = vpop.f32.mrb[0].mxu0
    %537 = vmatprep.mubr.f32.mxu0 0.0
    %538 = vmatmul.mubr.f32.gmra.mrb[0].mxu0 %v396
    %v539 = vpop.f32.mrb[0].mxu0
    %v540 = vadd.f32 0.0, %v539
    %v541 = vpop.f32.mrb[0].mxu0
    %542 = vmatprep.mubr.f32.mxu0 0.0
    %543 = vmatmul.mubr.f32.gmra.mrb[0].mxu0 %v399
    %v544 = vpop.f32.mrb[0].mxu0
    %v545 = vadd.f32 0.0, %v544
    %v546 = vpop.f32.mrb[0].mxu0
    %547 = vmatprep.mubr.f32.mxu0 0.0
    %548 = vmatmul.mubr.f32.gmra.mrb[0].mxu0 %v402
    %v549 = vpop.f32.mrb[0].mxu0
    %v550 = vadd.f32 0.0, %v549
    %v551 = vpop.f32.mrb[0].mxu0
    %552 = vmatprep.mubr.f32.mxu0 0.0
    %553 = vmatmul.mubr.f32.gmra.mrb[0].mxu0 %v405
    %v554 = vpop.f32.mrb[0].mxu0
    %v555 = vadd.f32 0.0, %v554
    %v556 = vpop.f32.mrb[0].mxu0
    %557 = vmatprep.mubr.f32.mxu0 0.0
    %558 = vmatmul.mubr.f32.gmra.mrb[0].mxu0 %v408
    %v559 = vpop.f32.mrb[0].mxu0
    %v560 = vadd.f32 0.0, %v559
    %v561 = vpop.f32.mrb[0].mxu0
    %562 = vmatprep.mubr.f32.mxu0 0.0
    %563 = vmatmul.mubr.f32.gmra.mrb[0].mxu0 %v411
    %v564 = vpop.f32.mrb[0].mxu0
    %v565 = vadd.f32 0.0, %v564
    %v566 = vpop.f32.mrb[0].mxu0
    %567 = vmatprep.mubr.f32.mxu0 0.0
    %568 = vmatmul.mubr.f32.gmra.mrb[0].mxu0 %v414
    %v569 = vpop.f32.mrb[0].mxu0
    %v570 = vadd.f32 0.0, %v569
    %v571 = vpop.f32.mrb[0].mxu0
    %572 = vmatprep.mubr.f32.mxu0 0.0
    %573 = vmatmul.mubr.f32.gmra.mrb[0].mxu0 %v417
    %v574 = vpop.f32.mrb[0].mxu0
    %v575 = vadd.f32 0.0, %v574
    %v576 = vpop.f32.mrb[0].mxu0
    %577 = vmatprep.mubr.f32.mxu0 0.0
    %578 = vmatmul.mubr.f32.gmra.mrb[0].mxu0 %v420
    %v579 = vpop.f32.mrb[0].mxu0
    %v580 = vadd.f32 0.0, %v579
    %v581 = vpop.f32.mrb[0].mxu0
    %582 = vmatprep.mubr.f32.mxu0 0.0
    %583 = vmatmul.mubr.f32.gmra.mrb[0].mxu0 %v423
    %v584 = vpop.f32.mrb[0].mxu0
    %v585 = vadd.f32 0.0, %v584
    %v586 = vpop.f32.mrb[0].mxu0
    %587 = vmatprep.mubr.f32.mxu0 0.0
    %588 = vmatmul.mubr.f32.gmra.mrb[0].mxu0 %v426
    %v589 = vpop.f32.mrb[0].mxu0
    %v590 = vadd.f32 0.0, %v589
    %v591 = vpop.f32.mrb[0].mxu0
    %592 = vmatprep.mubr.f32.mxu0 0.0
    %593 = vmatmul.mubr.f32.gmra.mrb[0].mxu0 %v429
    %v594 = vpop.f32.mrb[0].mxu0
    %v595 = vadd.f32 0.0, %v594
    %v596 = vpop.f32.mrb[0].mxu0
    %597 = vmatprep.mubr.f32.mxu0 0.0
    %598 = vmatmul.mubr.f32.gmra.mrb[0].mxu0 %v432
    %v599 = vpop.f32.mrb[0].mxu0
    %v600 = vadd.f32 0.0, %v599
    %v601 = vpop.f32.mrb[0].mxu0
    %602 = vmatprep.mubr.f32.mxu0 0.0
    %603 = vmatmul.mubr.f32.gmra.mrb[0].mxu0 %v435
    %v604 = vpop.f32.mrb[0].mxu0
    %v605 = vadd.f32 0.0, %v604
    %v606 = vpop.f32.mrb[0].mxu0
    %607 = vmatprep.mubr.f32.mxu0 0.0
    %608 = vmatmul.mubr.f32.gmra.mrb[0].mxu0 %v438
    %v609 = vpop.f32.mrb[0].mxu0
    %v610 = vadd.f32 0.0, %v609
    %v611 = vpop.f32.mrb[0].mxu0
    %612 = vmatprep.mubr.f32.mxu0 0.0
    %613 = vmatmul.mubr.f32.gmra.mrb[0].mxu0 %v441
    %v614 = vpop.f32.mrb[0].mxu0
    %v615 = vadd.f32 0.0, %v614
    %v616 = vpop.f32.mrb[0].mxu0
    %617 = vdwg.mxu0
    %v619 = vsel %vm376, %v332, 0
    %v622 = vsel %vm376, %v333, 0
    %v625 = vsel %vm376, %v334, 0
    %v628 = vsel %vm376, %v335, 0
    %v631 = vsel %vm376, %v336, 0
    %v634 = vsel %vm376, %v337, 0
    %v637 = vsel %vm376, %v338, 0
    %v640 = vsel %vm376, %v339, 0
    %v643 = vsel %vm376, %v340, 0
    %v646 = vsel %vm376, %v341, 0
    %v649 = vsel %vm376, %v342, 0
    %v652 = vsel %vm376, %v343, 0
    %v655 = vsel %vm376, %v344, 0
    %v658 = vsel %vm376, %v345, 0
    %v661 = vsel %vm376, %v346, 0
    %v664 = vsel %vm376, %v347, 0
    %v667 = vsel %vm376, %v348, 0
    %v670 = vsel %vm376, %v349, 0
    %v673 = vsel %vm376, %v350, 0
    %v676 = vsel %vm376, %v351, 0
    %v679 = vsel %vm376, %v352, 0
    %v682 = vsel %vm376, %v353, 0
    %684 = vmatprep.subr.mxu0 0.0
    %685 = vmatpush1.msra.mxu0 %v166
    %686 = vmatprep.subr.mxu0 0.0
    %687 = vmatpush1.msra.mxu0 %v171
    %688 = vmatprep.subr.mxu0 0.0
    %689 = vmatpush1.msra.mxu0 0.0
    %690 = vmatprep.subr.mxu0 0.0
    %691 = vmatpush1.msra.mxu0 0.0
    %692 = vmatprep.subr.mxu0 0.0
    %693 = vmatpush1.msra.mxu0 0.0
    %694 = vmatprep.subr.mxu0 0.0
    %695 = vmatpush1.msra.mxu0 0.0
    %696 = vmatprep.subr.mxu0 0.0
    %697 = vmatpush1.msra.mxu0 0.0
    %698 = vmatprep.subr.mxu0 0.0
    %699 = vmatpush1.msra.mxu0 0.0
    %700 = vmatprep.subr.mxu0 0.0
    %701 = vmatpush1.msra.mxu0 0.0
    %702 = vmatprep.subr.mxu0 0.0
    %703 = vmatpush1.msra.mxu0 0.0
    %704 = vmatprep.subr.mxu0 0.0
    %705 = vmatpush1.msra.mxu0 0.0
    %706 = vmatprep.subr.mxu0 0.0
    %707 = vmatpush1.msra.mxu0 0.0
    %708 = vmatprep.subr.mxu0 0.0
    %709 = vmatpush1.msra.mxu0 0.0
    %710 = vmatprep.subr.mxu0 0.0
    %711 = vmatpush1.msra.mxu0 0.0
    %712 = vmatprep.subr.mxu0 0.0
    %713 = vmatpush1.msra.mxu0 0.0
    %714 = vmatprep.subr.mxu0 0.0
    %715 = vmatpush1.msra.mxu0 0.0
    %716 = vmatprep.subr.mxu0 0.0
    %717 = vmatpush1.msra.mxu0 0.0
    %718 = vmatprep.subr.mxu0 0.0
    %719 = vmatpush1.msra.mxu0 0.0
    %720 = vmatprep.subr.mxu0 0.0
    %721 = vmatpush1.msra.mxu0 0.0
    %722 = vmatprep.subr.mxu0 0.0
    %723 = vmatpush1.msra.mxu0 0.0
    %724 = vmatprep.subr.mxu0 0.0
    %725 = vmatpush1.msra.mxu0 0.0
    %726 = vmatprep.subr.mxu0 0.0
    %727 = vmatpush1.msra.mxu0 0.0
    %728 = vmatprep.subr.mxu0 0.0
    %729 = vmatpush1.msra.mxu0 0.0
    %730 = vmatprep.subr.mxu0 0.0
    %731 = vmatpush1.msra.mxu0 0.0
    %732 = vmatprep.subr.mxu0 0.0
    %733 = vmatpush1.msra.mxu0 0.0
    %734 = vmatprep.subr.mxu0 0.0
    %735 = vmatpush1.msra.mxu0 0.0
    %736 = vmatprep.subr.mxu0 0.0
    %737 = vmatpush1.msra.mxu0 0.0
    %738 = vmatprep.subr.mxu0 0.0
    %739 = vmatpush1.msra.mxu0 0.0
    %740 = vmatprep.subr.mxu0 0.0
    %741 = vmatpush1.msra.mxu0 0.0
    %742 = vmatprep.subr.mxu0 0.0
    %743 = vmatpush1.msra.mxu0 0.0
    %744 = vmatprep.subr.mxu0 0.0
    %745 = vmatpush1.msra.mxu0 0.0
    %746 = vmatprep.subr.mxu0 0.0
    %747 = vmatpush1.msra.mxu0 0.0
    %748 = vmatprep.mubr.f32.mxu0 0.0
    %749 = vmatmul.mubr.f32.gmra.mrb[0].mxu0 %v619
    %v750 = vpop.f32.mrb[0].mxu0
    %v751 = vadd.f32 %v510, %v750
    %v752 = vpop.f32.mrb[0].mxu0
    %753 = vmatprep.mubr.f32.mxu0 0.0
    %754 = vmatmul.mubr.f32.gmra.mrb[0].mxu0 %v622
    %v755 = vpop.f32.mrb[0].mxu0
    %v756 = vadd.f32 %v515, %v755
    %v757 = vpop.f32.mrb[0].mxu0
    %758 = vmatprep.mubr.f32.mxu0 0.0
    %759 = vmatmul.mubr.f32.gmra.mrb[0].mxu0 %v625
    %v760 = vpop.f32.mrb[0].mxu0
    %v761 = vadd.f32 %v520, %v760
    %v762 = vpop.f32.mrb[0].mxu0
    %763 = vmatprep.mubr.f32.mxu0 0.0
    %764 = vmatmul.mubr.f32.gmra.mrb[0].mxu0 %v628
    %v765 = vpop.f32.mrb[0].mxu0
    %v766 = vadd.f32 %v525, %v765
    %v767 = vpop.f32.mrb[0].mxu0
    %768 = vmatprep.mubr.f32.mxu0 0.0
    %769 = vmatmul.mubr.f32.gmra.mrb[0].mxu0 %v631
    %v770 = vpop.f32.mrb[0].mxu0
    %v771 = vadd.f32 %v530, %v770
    %v772 = vpop.f32.mrb[0].mxu0
    %773 = vmatprep.mubr.f32.mxu0 0.0
    %774 = vmatmul.mubr.f32.gmra.mrb[0].mxu0 %v634
    %v775 = vpop.f32.mrb[0].mxu0
    %v776 = vadd.f32 %v535, %v775
    %v777 = vpop.f32.mrb[0].mxu0
    %778 = vmatprep.mubr.f32.mxu0 0.0
    %779 = vmatmul.mubr.f32.gmra.mrb[0].mxu0 %v637
    %v780 = vpop.f32.mrb[0].mxu0
    %v781 = vadd.f32 %v540, %v780
    %v782 = vpop.f32.mrb[0].mxu0
    %783 = vmatprep.mubr.f32.mxu0 0.0
    %784 = vmatmul.mubr.f32.gmra.mrb[0].mxu0 %v640
    %v785 = vpop.f32.mrb[0].mxu0
    %v786 = vadd.f32 %v545, %v785
    %v787 = vpop.f32.mrb[0].mxu0
    %788 = vmatprep.mubr.f32.mxu0 0.0
    %789 = vmatmul.mubr.f32.gmra.mrb[0].mxu0 %v643
    %v790 = vpop.f32.mrb[0].mxu0
    %v791 = vadd.f32 %v550, %v790
    %v792 = vpop.f32.mrb[0].mxu0
    %793 = vmatprep.mubr.f32.mxu0 0.0
    %794 = vmatmul.mubr.f32.gmra.mrb[0].mxu0 %v646
    %v795 = vpop.f32.mrb[0].mxu0
    %v796 = vadd.f32 %v555, %v795
    %v797 = vpop.f32.mrb[0].mxu0
    %798 = vmatprep.mubr.f32.mxu0 0.0
    %799 = vmatmul.mubr.f32.gmra.mrb[0].mxu0 %v649
    %v800 = vpop.f32.mrb[0].mxu0
    %v801 = vadd.f32 %v560, %v800
    %v802 = vpop.f32.mrb[0].mxu0
    %803 = vmatprep.mubr.f32.mxu0 0.0
    %804 = vmatmul.mubr.f32.gmra.mrb[0].mxu0 %v652
    %v805 = vpop.f32.mrb[0].mxu0
    %v806 = vadd.f32 %v565, %v805
    %v807 = vpop.f32.mrb[0].mxu0
    %808 = vmatprep.mubr.f32.mxu0 0.0
    %809 = vmatmul.mubr.f32.gmra.mrb[0].mxu0 %v655
    %v810 = vpop.f32.mrb[0].mxu0
    %v811 = vadd.f32 %v570, %v810
    %v812 = vpop.f32.mrb[0].mxu0
    %813 = vmatprep.mubr.f32.mxu0 0.0
    %814 = vmatmul.mubr.f32.gmra.mrb[0].mxu0 %v658
    %v815 = vpop.f32.mrb[0].mxu0
    %v816 = vadd.f32 %v575, %v815
    %v817 = vpop.f32.mrb[0].mxu0
    %818 = vmatprep.mubr.f32.mxu0 0.0
    %819 = vmatmul.mubr.f32.gmra.mrb[0].mxu0 %v661
    %v820 = vpop.f32.mrb[0].mxu0
    %v821 = vadd.f32 %v580, %v820
    %v822 = vpop.f32.mrb[0].mxu0
    %823 = vmatprep.mubr.f32.mxu0 0.0
    %824 = vmatmul.mubr.f32.gmra.mrb[0].mxu0 %v664
    %v825 = vpop.f32.mrb[0].mxu0
    %v826 = vadd.f32 %v585, %v825
    %v827 = vpop.f32.mrb[0].mxu0
    %828 = vmatprep.mubr.f32.mxu0 0.0
    %829 = vmatmul.mubr.f32.gmra.mrb[0].mxu0 %v667
    %v830 = vpop.f32.mrb[0].mxu0
    %v831 = vadd.f32 %v590, %v830
    %v832 = vpop.f32.mrb[0].mxu0
    %833 = vmatprep.mubr.f32.mxu0 0.0
    %834 = vmatmul.mubr.f32.gmra.mrb[0].mxu0 %v670
    %v835 = vpop.f32.mrb[0].mxu0
    %v836 = vadd.f32 %v595, %v835
    %v837 = vpop.f32.mrb[0].mxu0
    %838 = vmatprep.mubr.f32.mxu0 0.0
    %839 = vmatmul.mubr.f32.gmra.mrb[0].mxu0 %v673
    %v840 = vpop.f32.mrb[0].mxu0
    %v841 = vadd.f32 %v600, %v840
    %v842 = vpop.f32.mrb[0].mxu0
    %843 = vmatprep.mubr.f32.mxu0 0.0
    %844 = vmatmul.mubr.f32.gmra.mrb[0].mxu0 %v676
    %v845 = vpop.f32.mrb[0].mxu0
    %v846 = vadd.f32 %v605, %v845
    %v847 = vpop.f32.mrb[0].mxu0
    %848 = vmatprep.mubr.f32.mxu0 0.0
    %849 = vmatmul.mubr.f32.gmra.mrb[0].mxu0 %v679
    %v850 = vpop.f32.mrb[0].mxu0
    %v851 = vadd.f32 %v610, %v850
    %v852 = vpop.f32.mrb[0].mxu0
    %853 = vmatprep.mubr.f32.mxu0 0.0
    %854 = vmatmul.mubr.f32.gmra.mrb[0].mxu0 %v682
    %v855 = vpop.f32.mrb[0].mxu0
    %v856 = vadd.f32 %v615, %v855
    %v857 = vpop.f32.mrb[0].mxu0
    %858 = vdwg.mxu0
    %v859 = vld [vmem:[%s4] sm:$0xff]
    %v860 = vld [vmem:[%s4 + $0x8] sm:$0xff]
    %v861 = vld [vmem:[%s4 + $0x10] sm:$0xff]
    %v862 = vld [vmem:[%s4 + $0x18] sm:$0xff]
    %v863 = vld [vmem:[%s4 + $0x20] sm:$0xff]
    %v864 = vld [vmem:[%s4 + $0x28] sm:$0xff]
    %v865 = vld [vmem:[%s4 + $0x30] sm:$0xff]
    %v866 = vld [vmem:[%s4 + $0x38] sm:$0xff]
    %v867 = vld [vmem:[%s4 + $0x40] sm:$0xff]
    %v868 = vld [vmem:[%s4 + $0x48] sm:$0xff]
    %v869 = vld [vmem:[%s4 + $0x50] sm:$0xff]
    %v870 = vld [vmem:[%s4 + $0x58] sm:$0xff]
    %v871 = vld [vmem:[%s4 + $0x60] sm:$0xff]
    %v872 = vld [vmem:[%s4 + $0x68] sm:$0xff]
    %v873 = vld [vmem:[%s4 + $0x70] sm:$0xff]
    %v874 = vld [vmem:[%s4 + $0x78] sm:$0xff]
    %v875 = vld [vmem:[%s4 + $0x80] sm:$0xff]
    %v876 = vld [vmem:[%s4 + $0x88] sm:$0xff]
    %v877 = vld [vmem:[%s4 + $0x90] sm:$0xff]
    %v878 = vld [vmem:[%s4 + $0x98] sm:$0xff]
    %v879 = vld [vmem:[%s4 + $0xa0] sm:$0xff]
    %v880 = vld [vmem:[%s4 + $0xa8] sm:$0xff]
    %vm881 = vcmask 64512
    %v883 = vsel %vm881, %v859, 0
    %v886 = vsel %vm881, %v860, 0
    %v889 = vsel %vm881, %v861, 0
    %v892 = vsel %vm881, %v862, 0
    %v895 = vsel %vm881, %v863, 0
    %v898 = vsel %vm881, %v864, 0
    %v901 = vsel %vm881, %v865, 0
    %v904 = vsel %vm881, %v866, 0
    %v907 = vsel %vm881, %v867, 0
    %v910 = vsel %vm881, %v868, 0
    %v913 = vsel %vm881, %v869, 0
    %v916 = vsel %vm881, %v870, 0
    %v919 = vsel %vm881, %v871, 0
    %v922 = vsel %vm881, %v872, 0
    %v925 = vsel %vm881, %v873, 0
    %v928 = vsel %vm881, %v874, 0
    %v931 = vsel %vm881, %v875, 0
    %v934 = vsel %vm881, %v876, 0
    %v937 = vsel %vm881, %v877, 0
    %v940 = vsel %vm881, %v878, 0
    %v943 = vsel %vm881, %v879, 0
    %v946 = vsel %vm881, %v880, 0
    %948 = vmatprep.subr.mxu0 0.0
    %949 = vmatpush1.msra.mxu0 %v329
    %950 = vmatprep.subr.mxu0 0.0
    %951 = vmatpush1.msra.mxu0 0.0
    %952 = vmatprep.subr.mxu0 0.0
    %953 = vmatpush1.msra.mxu0 0.0
    %954 = vmatprep.subr.mxu0 0.0
    %955 = vmatpush1.msra.mxu0 0.0
    %956 = vmatprep.subr.mxu0 0.0
    %957 = vmatpush1.msra.mxu0 0.0
    %958 = vmatprep.subr.mxu0 0.0
    %959 = vmatpush1.msra.mxu0 0.0
    %960 = vmatprep.subr.mxu0 0.0
    %961 = vmatpush1.msra.mxu0 0.0
    %962 = vmatprep.subr.mxu0 0.0
    %963 = vmatpush1.msra.mxu0 0.0
    %964 = vmatprep.subr.mxu0 0.0
    %965 = vmatpush1.msra.mxu0 0.0
    %966 = vmatprep.subr.mxu0 0.0
    %967 = vmatpush1.msra.mxu0 0.0
    %968 = vmatprep.subr.mxu0 0.0
    %969 = vmatpush1.msra.mxu0 0.0
    %970 = vmatprep.subr.mxu0 0.0
    %971 = vmatpush1.msra.mxu0 0.0
    %972 = vmatprep.subr.mxu0 0.0
    %973 = vmatpush1.msra.mxu0 0.0
    %974 = vmatprep.subr.mxu0 0.0
    %975 = vmatpush1.msra.mxu0 0.0
    %976 = vmatprep.subr.mxu0 0.0
    %977 = vmatpush1.msra.mxu0 0.0
    %978 = vmatprep.subr.mxu0 0.0
    %979 = vmatpush1.msra.mxu0 0.0
    %980 = vmatprep.subr.mxu0 0.0
    %981 = vmatpush1.msra.mxu0 0.0
    %982 = vmatprep.subr.mxu0 0.0
    %983 = vmatpush1.msra.mxu0 0.0
    %984 = vmatprep.subr.mxu0 0.0
    %985 = vmatpush1.msra.mxu0 0.0
    %986 = vmatprep.subr.mxu0 0.0
    %987 = vmatpush1.msra.mxu0 0.0
    %988 = vmatprep.subr.mxu0 0.0
    %989 = vmatpush1.msra.mxu0 0.0
    %990 = vmatprep.subr.mxu0 0.0
    %991 = vmatpush1.msra.mxu0 0.0
    %992 = vmatprep.subr.mxu0 0.0
    %993 = vmatpush1.msra.mxu0 0.0
    %994 = vmatprep.subr.mxu0 0.0
    %995 = vmatpush1.msra.mxu0 0.0
    %996 = vmatprep.subr.mxu0 0.0
    %997 = vmatpush1.msra.mxu0 0.0
    %998 = vmatprep.subr.mxu0 0.0
    %999 = vmatpush1.msra.mxu0 0.0
    %1000 = vmatprep.subr.mxu0 0.0
    %1001 = vmatpush1.msra.mxu0 0.0
    %1002 = vmatprep.subr.mxu0 0.0
    %1003 = vmatpush1.msra.mxu0 0.0
    %1004 = vmatprep.subr.mxu0 0.0
    %1005 = vmatpush1.msra.mxu0 0.0
    %1006 = vmatprep.subr.mxu0 0.0
    %1007 = vmatpush1.msra.mxu0 0.0
    %1008 = vmatprep.subr.mxu0 0.0
    %1009 = vmatpush1.msra.mxu0 0.0
    %1010 = vmatprep.subr.mxu0 0.0
    %1011 = vmatpush1.msra.mxu0 0.0
    %1012 = vmatprep.mubr.f32.mxu0 0.0
    %1013 = vmatmul.mubr.f32.gmra.mrb[0].mxu0 %v883
    %v1014 = vpop.f32.mrb[0].mxu0
    %v1015 = vadd.f32 0.0, %v1014
    %v1016 = vpop.f32.mrb[0].mxu0
    %1017 = vmatprep.mubr.f32.mxu0 0.0
    %1018 = vmatmul.mubr.f32.gmra.mrb[0].mxu0 %v886
    %v1019 = vpop.f32.mrb[0].mxu0
    %v1020 = vadd.f32 0.0, %v1019
    %v1021 = vpop.f32.mrb[0].mxu0
    %1022 = vmatprep.mubr.f32.mxu0 0.0
    %1023 = vmatmul.mubr.f32.gmra.mrb[0].mxu0 %v889
    %v1024 = vpop.f32.mrb[0].mxu0
    %v1025 = vadd.f32 0.0, %v1024
    %v1026 = vpop.f32.mrb[0].mxu0
    %1027 = vmatprep.mubr.f32.mxu0 0.0
    %1028 = vmatmul.mubr.f32.gmra.mrb[0].mxu0 %v892
    %v1029 = vpop.f32.mrb[0].mxu0
    %v1030 = vadd.f32 0.0, %v1029
    %v1031 = vpop.f32.mrb[0].mxu0
    %1032 = vmatprep.mubr.f32.mxu0 0.0
    %1033 = vmatmul.mubr.f32.gmra.mrb[0].mxu0 %v895
    %v1034 = vpop.f32.mrb[0].mxu0
    %v1035 = vadd.f32 0.0, %v1034
    %v1036 = vpop.f32.mrb[0].mxu0
    %1037 = vmatprep.mubr.f32.mxu0 0.0
    %1038 = vmatmul.mubr.f32.gmra.mrb[0].mxu0 %v898
    %v1039 = vpop.f32.mrb[0].mxu0
    %v1040 = vadd.f32 0.0, %v1039
    %v1041 = vpop.f32.mrb[0].mxu0
    %1042 = vmatprep.mubr.f32.mxu0 0.0
    %1043 = vmatmul.mubr.f32.gmra.mrb[0].mxu0 %v901
    %v1044 = vpop.f32.mrb[0].mxu0
    %v1045 = vadd.f32 0.0, %v1044
    %v1046 = vpop.f32.mrb[0].mxu0
    %1047 = vmatprep.mubr.f32.mxu0 0.0
    %1048 = vmatmul.mubr.f32.gmra.mrb[0].mxu0 %v904
    %v1049 = vpop.f32.mrb[0].mxu0
    %v1050 = vadd.f32 0.0, %v1049
    %v1051 = vpop.f32.mrb[0].mxu0
    %1052 = vmatprep.mubr.f32.mxu0 0.0
    %1053 = vmatmul.mubr.f32.gmra.mrb[0].mxu0 %v907
    %v1054 = vpop.f32.mrb[0].mxu0
    %v1055 = vadd.f32 0.0, %v1054
    %v1056 = vpop.f32.mrb[0].mxu0
    %1057 = vmatprep.mubr.f32.mxu0 0.0
    %1058 = vmatmul.mubr.f32.gmra.mrb[0].mxu0 %v910
    %v1059 = vpop.f32.mrb[0].mxu0
    %v1060 = vadd.f32 0.0, %v1059
    %v1061 = vpop.f32.mrb[0].mxu0
    %1062 = vmatprep.mubr.f32.mxu0 0.0
    %1063 = vmatmul.mubr.f32.gmra.mrb[0].mxu0 %v913
    %v1064 = vpop.f32.mrb[0].mxu0
    %v1065 = vadd.f32 0.0, %v1064
    %v1066 = vpop.f32.mrb[0].mxu0
    %1067 = vmatprep.mubr.f32.mxu0 0.0
    %1068 = vmatmul.mubr.f32.gmra.mrb[0].mxu0 %v916
    %v1069 = vpop.f32.mrb[0].mxu0
    %v1070 = vadd.f32 0.0, %v1069
    %v1071 = vpop.f32.mrb[0].mxu0
    %1072 = vmatprep.mubr.f32.mxu0 0.0
    %1073 = vmatmul.mubr.f32.gmra.mrb[0].mxu0 %v919
    %v1074 = vpop.f32.mrb[0].mxu0
    %v1075 = vadd.f32 0.0, %v1074
    %v1076 = vpop.f32.mrb[0].mxu0
    %1077 = vmatprep.mubr.f32.mxu0 0.0
    %1078 = vmatmul.mubr.f32.gmra.mrb[0].mxu0 %v922
    %v1079 = vpop.f32.mrb[0].mxu0
    %v1080 = vadd.f32 0.0, %v1079
    %v1081 = vpop.f32.mrb[0].mxu0
    %1082 = vmatprep.mubr.f32.mxu0 0.0
    %1083 = vmatmul.mubr.f32.gmra.mrb[0].mxu0 %v925
    %v1084 = vpop.f32.mrb[0].mxu0
    %v1085 = vadd.f32 0.0, %v1084
    %v1086 = vpop.f32.mrb[0].mxu0
    %1087 = vmatprep.mubr.f32.mxu0 0.0
    %1088 = vmatmul.mubr.f32.gmra.mrb[0].mxu0 %v928
    %v1089 = vpop.f32.mrb[0].mxu0
    %v1090 = vadd.f32 0.0, %v1089
    %v1091 = vpop.f32.mrb[0].mxu0
    %1092 = vmatprep.mubr.f32.mxu0 0.0
    %1093 = vmatmul.mubr.f32.gmra.mrb[0].mxu0 %v931
    %v1094 = vpop.f32.mrb[0].mxu0
    %v1095 = vadd.f32 0.0, %v1094
    %v1096 = vpop.f32.mrb[0].mxu0
    %1097 = vmatprep.mubr.f32.mxu0 0.0
    %1098 = vmatmul.mubr.f32.gmra.mrb[0].mxu0 %v934
    %v1099 = vpop.f32.mrb[0].mxu0
    %v1100 = vadd.f32 0.0, %v1099
    %v1101 = vpop.f32.mrb[0].mxu0
    %1102 = vmatprep.mubr.f32.mxu0 0.0
    %1103 = vmatmul.mubr.f32.gmra.mrb[0].mxu0 %v937
    %v1104 = vpop.f32.mrb[0].mxu0
    %v1105 = vadd.f32 0.0, %v1104
    %v1106 = vpop.f32.mrb[0].mxu0
    %1107 = vmatprep.mubr.f32.mxu0 0.0
    %1108 = vmatmul.mubr.f32.gmra.mrb[0].mxu0 %v940
    %v1109 = vpop.f32.mrb[0].mxu0
    %v1110 = vadd.f32 0.0, %v1109
    %v1111 = vpop.f32.mrb[0].mxu0
    %1112 = vmatprep.mubr.f32.mxu0 0.0
    %1113 = vmatmul.mubr.f32.gmra.mrb[0].mxu0 %v943
    %v1114 = vpop.f32.mrb[0].mxu0
    %v1115 = vadd.f32 0.0, %v1114
    %v1116 = vpop.f32.mrb[0].mxu0
    %1117 = vmatprep.mubr.f32.mxu0 0.0
    %1118 = vmatmul.mubr.f32.gmra.mrb[0].mxu0 %v946
    %v1119 = vpop.f32.mrb[0].mxu0
    %v1120 = vadd.f32 0.0, %v1119
    %v1121 = vpop.f32.mrb[0].mxu0
    %1122 = vdwg.mxu0
    %v1123 = vadd.f32 %v751, %v1015
    %v1124 = vadd.f32 %v756, %v1020
    %v1125 = vadd.f32 %v761, %v1025
    %v1126 = vadd.f32 %v766, %v1030
    %v1127 = vadd.f32 %v771, %v1035
    %v1128 = vadd.f32 %v776, %v1040
    %v1129 = vadd.f32 %v781, %v1045
    %v1130 = vadd.f32 %v786, %v1050
    %v1131 = vadd.f32 %v791, %v1055
    %v1132 = vadd.f32 %v796, %v1060
    %v1133 = vadd.f32 %v801, %v1065
    %v1134 = vadd.f32 %v806, %v1070
    %v1135 = vadd.f32 %v811, %v1075
    %v1136 = vadd.f32 %v816, %v1080
    %v1137 = vadd.f32 %v821, %v1085
    %v1138 = vadd.f32 %v826, %v1090
    %v1139 = vadd.f32 %v831, %v1095
    %v1140 = vadd.f32 %v836, %v1100
    %v1141 = vadd.f32 %v841, %v1105
    %v1142 = vadd.f32 %v846, %v1110
    %v1143 = vadd.f32 %v851, %v1115
    %v1144 = vadd.f32 %v856, %v1120
    %v1145 = vld [vmem:[%s11] sm:$0x1]
    %v1147 = vlaneseq
    %v1148 = vshrl.u32 %v1147, 7
    %v1149 = vsub.s32 0, %v1148
    %v1150 = vrot.slane %v1145, %v1149
    %v1152 = vadd.f32 %v1123, %v1150
    %v1153 = vadd.f32 %v1124, %v1150
    %v1154 = vadd.f32 %v1125, %v1150
    %v1155 = vadd.f32 %v1126, %v1150
    %v1156 = vadd.f32 %v1127, %v1150
    %v1157 = vadd.f32 %v1128, %v1150
    %v1158 = vadd.f32 %v1129, %v1150
    %v1159 = vadd.f32 %v1130, %v1150
    %v1160 = vadd.f32 %v1131, %v1150
    %v1161 = vadd.f32 %v1132, %v1150
    %v1162 = vadd.f32 %v1133, %v1150
    %v1163 = vadd.f32 %v1134, %v1150
    %v1164 = vadd.f32 %v1135, %v1150
    %v1165 = vadd.f32 %v1136, %v1150
    %v1166 = vadd.f32 %v1137, %v1150
    %v1167 = vadd.f32 %v1138, %v1150
    %v1168 = vadd.f32 %v1139, %v1150
    %v1169 = vadd.f32 %v1140, %v1150
    %v1170 = vadd.f32 %v1141, %v1150
    %v1171 = vadd.f32 %v1142, %v1150
    %v1172 = vadd.f32 %v1143, %v1150
    %v1173 = vadd.f32 %v1144, %v1150
    %v1174 = vmax.f32 %v1152, 0.0
    %v1175 = vmax.f32 %v1153, 0.0
    %v1176 = vmax.f32 %v1154, 0.0
    %v1177 = vmax.f32 %v1155, 0.0
    %v1178 = vmax.f32 %v1156, 0.0
    %v1179 = vmax.f32 %v1157, 0.0
    %v1180 = vmax.f32 %v1158, 0.0
    %v1181 = vmax.f32 %v1159, 0.0
    %v1182 = vmax.f32 %v1160, 0.0
    %v1183 = vmax.f32 %v1161, 0.0
    %v1184 = vmax.f32 %v1162, 0.0
    %v1185 = vmax.f32 %v1163, 0.0
    %v1186 = vmax.f32 %v1164, 0.0
    %v1187 = vmax.f32 %v1165, 0.0
    %v1188 = vmax.f32 %v1166, 0.0
    %v1189 = vmax.f32 %v1167, 0.0
    %v1190 = vmax.f32 %v1168, 0.0
    %v1191 = vmax.f32 %v1169, 0.0
    %v1192 = vmax.f32 %v1170, 0.0
    %v1193 = vmax.f32 %v1171, 0.0
    %v1194 = vmax.f32 %v1172, 0.0
    %v1195 = vmax.f32 %v1173, 0.0
    %v1196 = vld [vmem:[%s12] sm:$0xff]
    %v1197 = vld [vmem:[%s12 + $0x8] sm:$0xff]
    %v1198 = vld [vmem:[%s12 + $0x10] sm:$0xff]
    %v1199 = vld [vmem:[%s12 + $0x18] sm:$0xff]
    %v1200 = vld [vmem:[%s12 + $0x20] sm:$0xff]
    %v1201 = vld [vmem:[%s12 + $0x28] sm:$0xff]
    %v1202 = vld [vmem:[%s12 + $0x30] sm:$0xff]
    %v1203 = vld [vmem:[%s12 + $0x38] sm:$0xff]
    %v1204 = vld [vmem:[%s13] sm:$0x1]
    %v1206 = vlaneseq
    %v1207 = vshrl.u32 %v1206, 7
    %v1208 = vsub.s32 0, %v1207
    %v1209 = vrot.slane %v1204, %v1208
    %vm1211 = vcmask 523264
    %v1213 = vsel %vm1211, %v1174, 0
    %v1216 = vsel %vm1211, %v1175, 0
    %v1219 = vsel %vm1211, %v1176, 0
    %v1222 = vsel %vm1211, %v1177, 0
    %v1225 = vsel %vm1211, %v1178, 0
    %v1228 = vsel %vm1211, %v1179, 0
    %v1231 = vsel %vm1211, %v1180, 0
    %v1234 = vsel %vm1211, %v1181, 0
    %v1237 = vsel %vm1211, %v1182, 0
    %v1240 = vsel %vm1211, %v1183, 0
    %v1243 = vsel %vm1211, %v1184, 0
    %v1246 = vsel %vm1211, %v1185, 0
    %v1249 = vsel %vm1211, %v1186, 0
    %v1252 = vsel %vm1211, %v1187, 0
    %v1255 = vsel %vm1211, %v1188, 0
    %v1258 = vsel %vm1211, %v1189, 0
    %v1261 = vsel %vm1211, %v1190, 0
    %v1264 = vsel %vm1211, %v1191, 0
    %v1267 = vsel %vm1211, %v1192, 0
    %v1270 = vsel %vm1211, %v1193, 0
    %v1273 = vsel %vm1211, %v1194, 0
    %v1276 = vsel %vm1211, %v1195, 0
    %1278 = vmatprep.subr.mxu0 0.0
    %1279 = vmatpush1.msra.mxu0 %v1196
    %1280 = vmatprep.subr.mxu0 0.0
    %1281 = vmatpush1.msra.mxu0 %v1197
    %1282 = vmatprep.subr.mxu0 0.0
    %1283 = vmatpush1.msra.mxu0 %v1198
    %1284 = vmatprep.subr.mxu0 0.0
    %1285 = vmatpush1.msra.mxu0 %v1199
    %1286 = vmatprep.subr.mxu0 0.0
    %1287 = vmatpush1.msra.mxu0 %v1200
    %1288 = vmatprep.subr.mxu0 0.0
    %1289 = vmatpush1.msra.mxu0 %v1201
    %1290 = vmatprep.subr.mxu0 0.0
    %1291 = vmatpush1.msra.mxu0 %v1202
    %1292 = vmatprep.subr.mxu0 0.0
    %1293 = vmatpush1.msra.mxu0 %v1203
    %1294 = vmatprep.subr.mxu0 0.0
    %1295 = vmatpush1.msra.mxu0 0.0
    %1296 = vmatprep.subr.mxu0 0.0
    %1297 = vmatpush1.msra.mxu0 0.0
    %1298 = vmatprep.subr.mxu0 0.0
    %1299 = vmatpush1.msra.mxu0 0.0
    %1300 = vmatprep.subr.mxu0 0.0
    %1301 = vmatpush1.msra.mxu0 0.0
    %1302 = vmatprep.subr.mxu0 0.0
    %1303 = vmatpush1.msra.mxu0 0.0
    %1304 = vmatprep.subr.mxu0 0.0
    %1305 = vmatpush1.msra.mxu0 0.0
    %1306 = vmatprep.subr.mxu0 0.0
    %1307 = vmatpush1.msra.mxu0 0.0
    %1308 = vmatprep.subr.mxu0 0.0
    %1309 = vmatpush1.msra.mxu0 0.0
    %1310 = vmatprep.subr.mxu0 0.0
    %1311 = vmatpush1.msra.mxu0 0.0
    %1312 = vmatprep.subr.mxu0 0.0
    %1313 = vmatpush1.msra.mxu0 0.0
    %1314 = vmatprep.subr.mxu0 0.0
    %1315 = vmatpush1.msra.mxu0 0.0
    %1316 = vmatprep.subr.mxu0 0.0
    %1317 = vmatpush1.msra.mxu0 0.0
    %1318 = vmatprep.subr.mxu0 0.0
    %1319 = vmatpush1.msra.mxu0 0.0
    %1320 = vmatprep.subr.mxu0 0.0
    %1321 = vmatpush1.msra.mxu0 0.0
    %1322 = vmatprep.subr.mxu0 0.0
    %1323 = vmatpush1.msra.mxu0 0.0
    %1324 = vmatprep.subr.mxu0 0.0
    %1325 = vmatpush1.msra.mxu0 0.0
    %1326 = vmatprep.subr.mxu0 0.0
    %1327 = vmatpush1.msra.mxu0 0.0
    %1328 = vmatprep.subr.mxu0 0.0
    %1329 = vmatpush1.msra.mxu0 0.0
    %1330 = vmatprep.subr.mxu0 0.0
    %1331 = vmatpush1.msra.mxu0 0.0
    %1332 = vmatprep.subr.mxu0 0.0
    %1333 = vmatpush1.msra.mxu0 0.0
    %1334 = vmatprep.subr.mxu0 0.0
    %1335 = vmatpush1.msra.mxu0 0.0
    %1336 = vmatprep.subr.mxu0 0.0
    %1337 = vmatpush1.msra.mxu0 0.0
    %1338 = vmatprep.subr.mxu0 0.0
    %1339 = vmatpush1.msra.mxu0 0.0
    %1340 = vmatprep.subr.mxu0 0.0
    %1341 = vmatpush1.msra.mxu0 0.0
    %1342 = vmatprep.mubr.f32.mxu0 0.0
    %1343 = vmatmul.mubr.f32.gmra.mrb[0].mxu0 %v1213
    %v1344 = vpop.f32.mrb[0].mxu0
    %v1345 = vadd.f32 %v1209, %v1344
    %v1346 = vpop.f32.mrb[0].mxu0
    %1347 = vmatprep.mubr.f32.mxu0 0.0
    %1348 = vmatmul.mubr.f32.gmra.mrb[0].mxu0 %v1216
    %v1349 = vpop.f32.mrb[0].mxu0
    %v1350 = vadd.f32 %v1209, %v1349
    %v1351 = vpop.f32.mrb[0].mxu0
    %1352 = vmatprep.mubr.f32.mxu0 0.0
    %1353 = vmatmul.mubr.f32.gmra.mrb[0].mxu0 %v1219
    %v1354 = vpop.f32.mrb[0].mxu0
    %v1355 = vadd.f32 %v1209, %v1354
    %v1356 = vpop.f32.mrb[0].mxu0
    %1357 = vmatprep.mubr.f32.mxu0 0.0
    %1358 = vmatmul.mubr.f32.gmra.mrb[0].mxu0 %v1222
    %v1359 = vpop.f32.mrb[0].mxu0
    %v1360 = vadd.f32 %v1209, %v1359
    %v1361 = vpop.f32.mrb[0].mxu0
    %1362 = vmatprep.mubr.f32.mxu0 0.0
    %1363 = vmatmul.mubr.f32.gmra.mrb[0].mxu0 %v1225
    %v1364 = vpop.f32.mrb[0].mxu0
    %v1365 = vadd.f32 %v1209, %v1364
    %v1366 = vpop.f32.mrb[0].mxu0
    %1367 = vmatprep.mubr.f32.mxu0 0.0
    %1368 = vmatmul.mubr.f32.gmra.mrb[0].mxu0 %v1228
    %v1369 = vpop.f32.mrb[0].mxu0
    %v1370 = vadd.f32 %v1209, %v1369
    %v1371 = vpop.f32.mrb[0].mxu0
    %1372 = vmatprep.mubr.f32.mxu0 0.0
    %1373 = vmatmul.mubr.f32.gmra.mrb[0].mxu0 %v1231
    %v1374 = vpop.f32.mrb[0].mxu0
    %v1375 = vadd.f32 %v1209, %v1374
    %v1376 = vpop.f32.mrb[0].mxu0
    %1377 = vmatprep.mubr.f32.mxu0 0.0
    %1378 = vmatmul.mubr.f32.gmra.mrb[0].mxu0 %v1234
    %v1379 = vpop.f32.mrb[0].mxu0
    %v1380 = vadd.f32 %v1209, %v1379
    %v1381 = vpop.f32.mrb[0].mxu0
    %1382 = vmatprep.mubr.f32.mxu0 0.0
    %1383 = vmatmul.mubr.f32.gmra.mrb[0].mxu0 %v1237
    %v1384 = vpop.f32.mrb[0].mxu0
    %v1385 = vadd.f32 %v1209, %v1384
    %v1386 = vpop.f32.mrb[0].mxu0
    %1387 = vmatprep.mubr.f32.mxu0 0.0
    %1388 = vmatmul.mubr.f32.gmra.mrb[0].mxu0 %v1240
    %v1389 = vpop.f32.mrb[0].mxu0
    %v1390 = vadd.f32 %v1209, %v1389
    %v1391 = vpop.f32.mrb[0].mxu0
    %1392 = vmatprep.mubr.f32.mxu0 0.0
    %1393 = vmatmul.mubr.f32.gmra.mrb[0].mxu0 %v1243
    %v1394 = vpop.f32.mrb[0].mxu0
    %v1395 = vadd.f32 %v1209, %v1394
    %v1396 = vpop.f32.mrb[0].mxu0
    %1397 = vmatprep.mubr.f32.mxu0 0.0
    %1398 = vmatmul.mubr.f32.gmra.mrb[0].mxu0 %v1246
    %v1399 = vpop.f32.mrb[0].mxu0
    %v1400 = vadd.f32 %v1209, %v1399
    %v1401 = vpop.f32.mrb[0].mxu0
    %1402 = vmatprep.mubr.f32.mxu0 0.0
    %1403 = vmatmul.mubr.f32.gmra.mrb[0].mxu0 %v1249
    %v1404 = vpop.f32.mrb[0].mxu0
    %v1405 = vadd.f32 %v1209, %v1404
    %v1406 = vpop.f32.mrb[0].mxu0
    %1407 = vmatprep.mubr.f32.mxu0 0.0
    %1408 = vmatmul.mubr.f32.gmra.mrb[0].mxu0 %v1252
    %v1409 = vpop.f32.mrb[0].mxu0
    %v1410 = vadd.f32 %v1209, %v1409
    %v1411 = vpop.f32.mrb[0].mxu0
    %1412 = vmatprep.mubr.f32.mxu0 0.0
    %1413 = vmatmul.mubr.f32.gmra.mrb[0].mxu0 %v1255
    %v1414 = vpop.f32.mrb[0].mxu0
    %v1415 = vadd.f32 %v1209, %v1414
    %v1416 = vpop.f32.mrb[0].mxu0
    %1417 = vmatprep.mubr.f32.mxu0 0.0
    %1418 = vmatmul.mubr.f32.gmra.mrb[0].mxu0 %v1258
    %v1419 = vpop.f32.mrb[0].mxu0
    %v1420 = vadd.f32 %v1209, %v1419
    %v1421 = vpop.f32.mrb[0].mxu0
    %1422 = vmatprep.mubr.f32.mxu0 0.0
    %1423 = vmatmul.mubr.f32.gmra.mrb[0].mxu0 %v1261
    %v1424 = vpop.f32.mrb[0].mxu0
    %v1425 = vadd.f32 %v1209, %v1424
    %v1426 = vpop.f32.mrb[0].mxu0
    %1427 = vmatprep.mubr.f32.mxu0 0.0
    %1428 = vmatmul.mubr.f32.gmra.mrb[0].mxu0 %v1264
    %v1429 = vpop.f32.mrb[0].mxu0
    %v1430 = vadd.f32 %v1209, %v1429
    %v1431 = vpop.f32.mrb[0].mxu0
    %1432 = vmatprep.mubr.f32.mxu0 0.0
    %1433 = vmatmul.mubr.f32.gmra.mrb[0].mxu0 %v1267
    %v1434 = vpop.f32.mrb[0].mxu0
    %v1435 = vadd.f32 %v1209, %v1434
    %v1436 = vpop.f32.mrb[0].mxu0
    %1437 = vmatprep.mubr.f32.mxu0 0.0
    %1438 = vmatmul.mubr.f32.gmra.mrb[0].mxu0 %v1270
    %v1439 = vpop.f32.mrb[0].mxu0
    %v1440 = vadd.f32 %v1209, %v1439
    %v1441 = vpop.f32.mrb[0].mxu0
    %1442 = vmatprep.mubr.f32.mxu0 0.0
    %1443 = vmatmul.mubr.f32.gmra.mrb[0].mxu0 %v1273
    %v1444 = vpop.f32.mrb[0].mxu0
    %v1445 = vadd.f32 %v1209, %v1444
    %v1446 = vpop.f32.mrb[0].mxu0
    %1447 = vmatprep.mubr.f32.mxu0 0.0
    %1448 = vmatmul.mubr.f32.gmra.mrb[0].mxu0 %v1276
    %v1449 = vpop.f32.mrb[0].mxu0
    %v1450 = vadd.f32 %v1209, %v1449
    %v1451 = vpop.f32.mrb[0].mxu0
    %1452 = vdwg.mxu0
    %v1453 = vmax.f32 %v1345, 0.0
    %v1454 = vmax.f32 %v1350, 0.0
    %v1455 = vmax.f32 %v1355, 0.0
    %v1456 = vmax.f32 %v1360, 0.0
    %v1457 = vmax.f32 %v1365, 0.0
    %v1458 = vmax.f32 %v1370, 0.0
    %v1459 = vmax.f32 %v1375, 0.0
    %v1460 = vmax.f32 %v1380, 0.0
    %v1461 = vmax.f32 %v1385, 0.0
    %v1462 = vmax.f32 %v1390, 0.0
    %v1463 = vmax.f32 %v1395, 0.0
    %v1464 = vmax.f32 %v1400, 0.0
    %v1465 = vmax.f32 %v1405, 0.0
    %v1466 = vmax.f32 %v1410, 0.0
    %v1467 = vmax.f32 %v1415, 0.0
    %v1468 = vmax.f32 %v1420, 0.0
    %v1469 = vmax.f32 %v1425, 0.0
    %v1470 = vmax.f32 %v1430, 0.0
    %v1471 = vmax.f32 %v1435, 0.0
    %v1472 = vmax.f32 %v1440, 0.0
    %v1473 = vmax.f32 %v1445, 0.0
    %v1474 = vmax.f32 %v1450, 0.0
    %v1475 = vld [vmem:[%s14] sm:$0xff]
    %v1476 = vld [vmem:[%s14 + $0x8] sm:$0xff]
    %v1477 = vld [vmem:[%s14 + $0x10] sm:$0xff]
    %v1478 = vld [vmem:[%s14 + $0x18] sm:$0xff]
    %v1479 = vld [vmem:[%s15] sm:$0x1]
    %v1481 = vlaneseq
    %v1482 = vshrl.u32 %v1481, 7
    %v1483 = vsub.s32 0, %v1482
    %v1484 = vrot.slane %v1479, %v1483
    %vm1486 = vcmask 261120
    %v1488 = vsel %vm1486, %v1453, 0
    %v1491 = vsel %vm1486, %v1454, 0
    %v1494 = vsel %vm1486, %v1455, 0
    %v1497 = vsel %vm1486, %v1456, 0
    %v1500 = vsel %vm1486, %v1457, 0
    %v1503 = vsel %vm1486, %v1458, 0
    %v1506 = vsel %vm1486, %v1459, 0
    %v1509 = vsel %vm1486, %v1460, 0
    %v1512 = vsel %vm1486, %v1461, 0
    %v1515 = vsel %vm1486, %v1462, 0
    %v1518 = vsel %vm1486, %v1463, 0
    %v1521 = vsel %vm1486, %v1464, 0
    %v1524 = vsel %vm1486, %v1465, 0
    %v1527 = vsel %vm1486, %v1466, 0
    %v1530 = vsel %vm1486, %v1467, 0
    %v1533 = vsel %vm1486, %v1468, 0
    %v1536 = vsel %vm1486, %v1469, 0
    %v1539 = vsel %vm1486, %v1470, 0
    %v1542 = vsel %vm1486, %v1471, 0
    %v1545 = vsel %vm1486, %v1472, 0
    %v1548 = vsel %vm1486, %v1473, 0
    %v1551 = vsel %vm1486, %v1474, 0
    %1553 = vmatprep.subr.mxu0 0.0
    %1554 = vmatpush1.msra.mxu0 %v1475
    %1555 = vmatprep.subr.mxu0 0.0
    %1556 = vmatpush1.msra.mxu0 %v1476
    %1557 = vmatprep.subr.mxu0 0.0
    %1558 = vmatpush1.msra.mxu0 %v1477
    %1559 = vmatprep.subr.mxu0 0.0
    %1560 = vmatpush1.msra.mxu0 %v1478
    %1561 = vmatprep.subr.mxu0 0.0
    %1562 = vmatpush1.msra.mxu0 0.0
    %1563 = vmatprep.subr.mxu0 0.0
    %1564 = vmatpush1.msra.mxu0 0.0
    %1565 = vmatprep.subr.mxu0 0.0
    %1566 = vmatpush1.msra.mxu0 0.0
    %1567 = vmatprep.subr.mxu0 0.0
    %1568 = vmatpush1.msra.mxu0 0.0
    %1569 = vmatprep.subr.mxu0 0.0
    %1570 = vmatpush1.msra.mxu0 0.0
    %1571 = vmatprep.subr.mxu0 0.0
    %1572 = vmatpush1.msra.mxu0 0.0
    %1573 = vmatprep.subr.mxu0 0.0
    %1574 = vmatpush1.msra.mxu0 0.0
    %1575 = vmatprep.subr.mxu0 0.0
    %1576 = vmatpush1.msra.mxu0 0.0
    %1577 = vmatprep.subr.mxu0 0.0
    %1578 = vmatpush1.msra.mxu0 0.0
    %1579 = vmatprep.subr.mxu0 0.0
    %1580 = vmatpush1.msra.mxu0 0.0
    %1581 = vmatprep.subr.mxu0 0.0
    %1582 = vmatpush1.msra.mxu0 0.0
    %1583 = vmatprep.subr.mxu0 0.0
    %1584 = vmatpush1.msra.mxu0 0.0
    %1585 = vmatprep.subr.mxu0 0.0
    %1586 = vmatpush1.msra.mxu0 0.0
    %1587 = vmatprep.subr.mxu0 0.0
    %1588 = vmatpush1.msra.mxu0 0.0
    %1589 = vmatprep.subr.mxu0 0.0
    %1590 = vmatpush1.msra.mxu0 0.0
    %1591 = vmatprep.subr.mxu0 0.0
    %1592 = vmatpush1.msra.mxu0 0.0
    %1593 = vmatprep.subr.mxu0 0.0
    %1594 = vmatpush1.msra.mxu0 0.0
    %1595 = vmatprep.subr.mxu0 0.0
    %1596 = vmatpush1.msra.mxu0 0.0
    %1597 = vmatprep.subr.mxu0 0.0
    %1598 = vmatpush1.msra.mxu0 0.0
    %1599 = vmatprep.subr.mxu0 0.0
    %1600 = vmatpush1.msra.mxu0 0.0
    %1601 = vmatprep.subr.mxu0 0.0
    %1602 = vmatpush1.msra.mxu0 0.0
    %1603 = vmatprep.subr.mxu0 0.0
    %1604 = vmatpush1.msra.mxu0 0.0
    %1605 = vmatprep.subr.mxu0 0.0
    %1606 = vmatpush1.msra.mxu0 0.0
    %1607 = vmatprep.subr.mxu0 0.0
    %1608 = vmatpush1.msra.mxu0 0.0
    %1609 = vmatprep.subr.mxu0 0.0
    %1610 = vmatpush1.msra.mxu0 0.0
    %1611 = vmatprep.subr.mxu0 0.0
    %1612 = vmatpush1.msra.mxu0 0.0
    %1613 = vmatprep.subr.mxu0 0.0
    %1614 = vmatpush1.msra.mxu0 0.0
    %1615 = vmatprep.subr.mxu0 0.0
    %1616 = vmatpush1.msra.mxu0 0.0
    %1617 = vmatprep.mubr.f32.mxu0 0.0
    %1618 = vmatmul.mubr.f32.gmra.mrb[0].mxu0 %v1488
    %v1619 = vpop.f32.mrb[0].mxu0
    %v1620 = vadd.f32 %v1484, %v1619
    %v1621 = vpop.f32.mrb[0].mxu0
    %1622 = vmatprep.mubr.f32.mxu0 0.0
    %1623 = vmatmul.mubr.f32.gmra.mrb[0].mxu0 %v1491
    %v1624 = vpop.f32.mrb[0].mxu0
    %v1625 = vadd.f32 %v1484, %v1624
    %v1626 = vpop.f32.mrb[0].mxu0
    %1627 = vmatprep.mubr.f32.mxu0 0.0
    %1628 = vmatmul.mubr.f32.gmra.mrb[0].mxu0 %v1494
    %v1629 = vpop.f32.mrb[0].mxu0
    %v1630 = vadd.f32 %v1484, %v1629
    %v1631 = vpop.f32.mrb[0].mxu0
    %1632 = vmatprep.mubr.f32.mxu0 0.0
    %1633 = vmatmul.mubr.f32.gmra.mrb[0].mxu0 %v1497
    %v1634 = vpop.f32.mrb[0].mxu0
    %v1635 = vadd.f32 %v1484, %v1634
    %v1636 = vpop.f32.mrb[0].mxu0
    %1637 = vmatprep.mubr.f32.mxu0 0.0
    %1638 = vmatmul.mubr.f32.gmra.mrb[0].mxu0 %v1500
    %v1639 = vpop.f32.mrb[0].mxu0
    %v1640 = vadd.f32 %v1484, %v1639
    %v1641 = vpop.f32.mrb[0].mxu0
    %1642 = vmatprep.mubr.f32.mxu0 0.0
    %1643 = vmatmul.mubr.f32.gmra.mrb[0].mxu0 %v1503
    %v1644 = vpop.f32.mrb[0].mxu0
    %v1645 = vadd.f32 %v1484, %v1644
    %v1646 = vpop.f32.mrb[0].mxu0
    %1647 = vmatprep.mubr.f32.mxu0 0.0
    %1648 = vmatmul.mubr.f32.gmra.mrb[0].mxu0 %v1506
    %v1649 = vpop.f32.mrb[0].mxu0
    %v1650 = vadd.f32 %v1484, %v1649
    %v1651 = vpop.f32.mrb[0].mxu0
    %1652 = vmatprep.mubr.f32.mxu0 0.0
    %1653 = vmatmul.mubr.f32.gmra.mrb[0].mxu0 %v1509
    %v1654 = vpop.f32.mrb[0].mxu0
    %v1655 = vadd.f32 %v1484, %v1654
    %v1656 = vpop.f32.mrb[0].mxu0
    %1657 = vmatprep.mubr.f32.mxu0 0.0
    %1658 = vmatmul.mubr.f32.gmra.mrb[0].mxu0 %v1512
    %v1659 = vpop.f32.mrb[0].mxu0
    %v1660 = vadd.f32 %v1484, %v1659
    %v1661 = vpop.f32.mrb[0].mxu0
    %1662 = vmatprep.mubr.f32.mxu0 0.0
    %1663 = vmatmul.mubr.f32.gmra.mrb[0].mxu0 %v1515
    %v1664 = vpop.f32.mrb[0].mxu0
    %v1665 = vadd.f32 %v1484, %v1664
    %v1666 = vpop.f32.mrb[0].mxu0
    %1667 = vmatprep.mubr.f32.mxu0 0.0
    %1668 = vmatmul.mubr.f32.gmra.mrb[0].mxu0 %v1518
    %v1669 = vpop.f32.mrb[0].mxu0
    %v1670 = vadd.f32 %v1484, %v1669
    %v1671 = vpop.f32.mrb[0].mxu0
    %1672 = vmatprep.mubr.f32.mxu0 0.0
    %1673 = vmatmul.mubr.f32.gmra.mrb[0].mxu0 %v1521
    %v1674 = vpop.f32.mrb[0].mxu0
    %v1675 = vadd.f32 %v1484, %v1674
    %v1676 = vpop.f32.mrb[0].mxu0
    %1677 = vmatprep.mubr.f32.mxu0 0.0
    %1678 = vmatmul.mubr.f32.gmra.mrb[0].mxu0 %v1524
    %v1679 = vpop.f32.mrb[0].mxu0
    %v1680 = vadd.f32 %v1484, %v1679
    %v1681 = vpop.f32.mrb[0].mxu0
    %1682 = vmatprep.mubr.f32.mxu0 0.0
    %1683 = vmatmul.mubr.f32.gmra.mrb[0].mxu0 %v1527
    %v1684 = vpop.f32.mrb[0].mxu0
    %v1685 = vadd.f32 %v1484, %v1684
    %v1686 = vpop.f32.mrb[0].mxu0
    %1687 = vmatprep.mubr.f32.mxu0 0.0
    %1688 = vmatmul.mubr.f32.gmra.mrb[0].mxu0 %v1530
    %v1689 = vpop.f32.mrb[0].mxu0
    %v1690 = vadd.f32 %v1484, %v1689
    %v1691 = vpop.f32.mrb[0].mxu0
    %1692 = vmatprep.mubr.f32.mxu0 0.0
    %1693 = vmatmul.mubr.f32.gmra.mrb[0].mxu0 %v1533
    %v1694 = vpop.f32.mrb[0].mxu0
    %v1695 = vadd.f32 %v1484, %v1694
    %v1696 = vpop.f32.mrb[0].mxu0
    %1697 = vmatprep.mubr.f32.mxu0 0.0
    %1698 = vmatmul.mubr.f32.gmra.mrb[0].mxu0 %v1536
    %v1699 = vpop.f32.mrb[0].mxu0
    %v1700 = vadd.f32 %v1484, %v1699
    %v1701 = vpop.f32.mrb[0].mxu0
    %1702 = vmatprep.mubr.f32.mxu0 0.0
    %1703 = vmatmul.mubr.f32.gmra.mrb[0].mxu0 %v1539
    %v1704 = vpop.f32.mrb[0].mxu0
    %v1705 = vadd.f32 %v1484, %v1704
    %v1706 = vpop.f32.mrb[0].mxu0
    %1707 = vmatprep.mubr.f32.mxu0 0.0
    %1708 = vmatmul.mubr.f32.gmra.mrb[0].mxu0 %v1542
    %v1709 = vpop.f32.mrb[0].mxu0
    %v1710 = vadd.f32 %v1484, %v1709
    %v1711 = vpop.f32.mrb[0].mxu0
    %1712 = vmatprep.mubr.f32.mxu0 0.0
    %1713 = vmatmul.mubr.f32.gmra.mrb[0].mxu0 %v1545
    %v1714 = vpop.f32.mrb[0].mxu0
    %v1715 = vadd.f32 %v1484, %v1714
    %v1716 = vpop.f32.mrb[0].mxu0
    %1717 = vmatprep.mubr.f32.mxu0 0.0
    %1718 = vmatmul.mubr.f32.gmra.mrb[0].mxu0 %v1548
    %v1719 = vpop.f32.mrb[0].mxu0
    %v1720 = vadd.f32 %v1484, %v1719
    %v1721 = vpop.f32.mrb[0].mxu0
    %1722 = vmatprep.mubr.f32.mxu0 0.0
    %1723 = vmatmul.mubr.f32.gmra.mrb[0].mxu0 %v1551
    %v1724 = vpop.f32.mrb[0].mxu0
    %v1725 = vadd.f32 %v1484, %v1724
    %v1726 = vpop.f32.mrb[0].mxu0
    %1727 = vdwg.mxu0
    %v1728 = vmax.f32 %v1620, 0.0
    %v1729 = vmax.f32 %v1625, 0.0
    %v1730 = vmax.f32 %v1630, 0.0
    %v1731 = vmax.f32 %v1635, 0.0
    %v1732 = vmax.f32 %v1640, 0.0
    %v1733 = vmax.f32 %v1645, 0.0
    %v1734 = vmax.f32 %v1650, 0.0
    %v1735 = vmax.f32 %v1655, 0.0
    %v1736 = vmax.f32 %v1660, 0.0
    %v1737 = vmax.f32 %v1665, 0.0
    %v1738 = vmax.f32 %v1670, 0.0
    %v1739 = vmax.f32 %v1675, 0.0
    %v1740 = vmax.f32 %v1680, 0.0
    %v1741 = vmax.f32 %v1685, 0.0
    %v1742 = vmax.f32 %v1690, 0.0
    %v1743 = vmax.f32 %v1695, 0.0
    %v1744 = vmax.f32 %v1700, 0.0
    %v1745 = vmax.f32 %v1705, 0.0
    %v1746 = vmax.f32 %v1710, 0.0
    %v1747 = vmax.f32 %v1715, 0.0
    %v1748 = vmax.f32 %v1720, 0.0
    %v1749 = vmax.f32 %v1725, 0.0
    %v1750 = vld [vmem:[%s5] sm:$0xff]
    %v1751 = vld [vmem:[%s5 + $0x8] sm:$0xff]
    %v1752 = vld [vmem:[%s5 + $0x10] sm:$0xff]
    %v1753 = vld [vmem:[%s5 + $0x18] sm:$0xff]
    %vm1754 = vcmask 392192
    %v1756 = vsel %vm1754, %v1751, 0
    %v1759 = vsel %vm1754, %v1753, 0
    %1761 = vmatprep.subr.mxu0 0.0
    %1762 = vmatpush1.msra.mxu0 %v1728
    %1763 = vmatprep.subr.mxu0 0.0
    %1764 = vmatpush1.msra.mxu0 %v1729
    %1765 = vmatprep.subr.mxu0 0.0
    %1766 = vmatpush1.msra.mxu0 %v1730
    %1767 = vmatprep.subr.mxu0 0.0
    %1768 = vmatpush1.msra.mxu0 %v1731
    %1769 = vmatprep.subr.mxu0 0.0
    %1770 = vmatpush1.msra.mxu0 %v1732
    %1771 = vmatprep.subr.mxu0 0.0
    %1772 = vmatpush1.msra.mxu0 %v1733
    %1773 = vmatprep.subr.mxu0 0.0
    %1774 = vmatpush1.msra.mxu0 %v1734
    %1775 = vmatprep.subr.mxu0 0.0
    %1776 = vmatpush1.msra.mxu0 %v1735
    %1777 = vmatprep.subr.mxu0 0.0
    %1778 = vmatpush1.msra.mxu0 %v1736
    %1779 = vmatprep.subr.mxu0 0.0
    %1780 = vmatpush1.msra.mxu0 %v1737
    %1781 = vmatprep.subr.mxu0 0.0
    %1782 = vmatpush1.msra.mxu0 %v1738
    %1783 = vmatprep.subr.mxu0 0.0
    %1784 = vmatpush1.msra.mxu0 %v1739
    %1785 = vmatprep.subr.mxu0 0.0
    %1786 = vmatpush1.msra.mxu0 %v1740
    %1787 = vmatprep.subr.mxu0 0.0
    %1788 = vmatpush1.msra.mxu0 %v1741
    %1789 = vmatprep.subr.mxu0 0.0
    %1790 = vmatpush1.msra.mxu0 %v1742
    %1791 = vmatprep.subr.mxu0 0.0
    %1792 = vmatpush1.msra.mxu0 %v1743
    %1793 = vmatprep.subr.mxu0 0.0
    %1794 = vmatpush1.msra.mxu0 %v1744
    %1795 = vmatprep.subr.mxu0 0.0
    %1796 = vmatpush1.msra.mxu0 %v1745
    %1797 = vmatprep.subr.mxu0 0.0
    %1798 = vmatpush1.msra.mxu0 %v1746
    %1799 = vmatprep.subr.mxu0 0.0
    %1800 = vmatpush1.msra.mxu0 %v1747
    %1801 = vmatprep.subr.mxu0 0.0
    %1802 = vmatpush1.msra.mxu0 %v1748
    %1803 = vmatprep.subr.mxu0 0.0
    %1804 = vmatpush1.msra.mxu0 %v1749
    %1805 = vmatprep.subr.mxu0 0.0
    %1806 = vmatpush1.msra.mxu0 0.0
    %1807 = vmatprep.subr.mxu0 0.0
    %1808 = vmatpush1.msra.mxu0 0.0
    %1809 = vmatprep.subr.mxu0 0.0
    %1810 = vmatpush1.msra.mxu0 0.0
    %1811 = vmatprep.subr.mxu0 0.0
    %1812 = vmatpush1.msra.mxu0 0.0
    %1813 = vmatprep.subr.mxu0 0.0
    %1814 = vmatpush1.msra.mxu0 0.0
    %1815 = vmatprep.subr.mxu0 0.0
    %1816 = vmatpush1.msra.mxu0 0.0
    %1817 = vmatprep.subr.mxu0 0.0
    %1818 = vmatpush1.msra.mxu0 0.0
    %1819 = vmatprep.subr.mxu0 0.0
    %1820 = vmatpush1.msra.mxu0 0.0
    %1821 = vmatprep.subr.mxu0 0.0
    %1822 = vmatpush1.msra.mxu0 0.0
    %1823 = vmatprep.subr.mxu0 0.0
    %1824 = vmatpush1.msra.mxu0 0.0
    %1825 = vmatprep.mubr.f32.mxu0 %v1756
    %1826 = vmatmul.mubr.f32.gmra.mrb[0].mxu0 %v1750
    %v1827 = vpop.f32.mrb[0].mxu0
    %v1828 = vadd.f32 0.0, %v1827
    %v1829 = vpop.f32.mrb[0].mxu0
    %1830 = vmatprep.mubr.f32.mxu0 %v1759
    %1831 = vmatmul.mubr.f32.gmra.mrb[0].mxu0 %v1752
    %v1832 = vpop.f32.mrb[0].mxu0
    %v1833 = vadd.f32 0.0, %v1832
    %v1834 = vpop.f32.mrb[0].mxu0
    %1835 = vdwg.mxu0
    %v1836 = vld [vmem:[%s6] sm:$0xff]
    %v1837 = vld [vmem:[%s6 + $0x8] sm:$0xff]
    %v1838 = vld [vmem:[%s6 + $0x10] sm:$0xff]
    %v1839 = vld [vmem:[%s6 + $0x18] sm:$0xff]
    %v1841 = vsel %vm1754, %v1837, 0
    %v1844 = vsel %vm1754, %v1839, 0
    %1846 = vmatprep.subr.mxu0 0.0
    %1847 = vmatpush1.msra.mxu0 %v1728
    %1848 = vmatprep.subr.mxu0 0.0
    %1849 = vmatpush1.msra.mxu0 %v1729
    %1850 = vmatprep.subr.mxu0 0.0
    %1851 = vmatpush1.msra.mxu0 %v1730
    %1852 = vmatprep.subr.mxu0 0.0
    %1853 = vmatpush1.msra.mxu0 %v1731
    %1854 = vmatprep.subr.mxu0 0.0
    %1855 = vmatpush1.msra.mxu0 %v1732
    %1856 = vmatprep.subr.mxu0 0.0
    %1857 = vmatpush1.msra.mxu0 %v1733
    %1858 = vmatprep.subr.mxu0 0.0
    %1859 = vmatpush1.msra.mxu0 %v1734
    %1860 = vmatprep.subr.mxu0 0.0
    %1861 = vmatpush1.msra.mxu0 %v1735
    %1862 = vmatprep.subr.mxu0 0.0
    %1863 = vmatpush1.msra.mxu0 %v1736
    %1864 = vmatprep.subr.mxu0 0.0
    %1865 = vmatpush1.msra.mxu0 %v1737
    %1866 = vmatprep.subr.mxu0 0.0
    %1867 = vmatpush1.msra.mxu0 %v1738
    %1868 = vmatprep.subr.mxu0 0.0
    %1869 = vmatpush1.msra.mxu0 %v1739
    %1870 = vmatprep.subr.mxu0 0.0
    %1871 = vmatpush1.msra.mxu0 %v1740
    %1872 = vmatprep.subr.mxu0 0.0
    %1873 = vmatpush1.msra.mxu0 %v1741
    %1874 = vmatprep.subr.mxu0 0.0
    %1875 = vmatpush1.msra.mxu0 %v1742
    %1876 = vmatprep.subr.mxu0 0.0
    %1877 = vmatpush1.msra.mxu0 %v1743
    %1878 = vmatprep.subr.mxu0 0.0
    %1879 = vmatpush1.msra.mxu0 %v1744
    %1880 = vmatprep.subr.mxu0 0.0
    %1881 = vmatpush1.msra.mxu0 %v1745
    %1882 = vmatprep.subr.mxu0 0.0
    %1883 = vmatpush1.msra.mxu0 %v1746
    %1884 = vmatprep.subr.mxu0 0.0
    %1885 = vmatpush1.msra.mxu0 %v1747
    %1886 = vmatprep.subr.mxu0 0.0
    %1887 = vmatpush1.msra.mxu0 %v1748
    %1888 = vmatprep.subr.mxu0 0.0
    %1889 = vmatpush1.msra.mxu0 %v1749
    %1890 = vmatprep.subr.mxu0 0.0
    %1891 = vmatpush1.msra.mxu0 0.0
    %1892 = vmatprep.subr.mxu0 0.0
    %1893 = vmatpush1.msra.mxu0 0.0
    %1894 = vmatprep.subr.mxu0 0.0
    %1895 = vmatpush1.msra.mxu0 0.0
    %1896 = vmatprep.subr.mxu0 0.0
    %1897 = vmatpush1.msra.mxu0 0.0
    %1898 = vmatprep.subr.mxu0 0.0
    %1899 = vmatpush1.msra.mxu0 0.0
    %1900 = vmatprep.subr.mxu0 0.0
    %1901 = vmatpush1.msra.mxu0 0.0
    %1902 = vmatprep.subr.mxu0 0.0
    %1903 = vmatpush1.msra.mxu0 0.0
    %1904 = vmatprep.subr.mxu0 0.0
    %1905 = vmatpush1.msra.mxu0 0.0
    %1906 = vmatprep.subr.mxu0 0.0
    %1907 = vmatpush1.msra.mxu0 0.0
    %1908 = vmatprep.subr.mxu0 0.0
    %1909 = vmatpush1.msra.mxu0 0.0
    %1910 = vmatprep.mubr.f32.mxu0 %v1841
    %1911 = vmatmul.mubr.f32.gmra.mrb[0].mxu0 %v1836
    %v1912 = vpop.f32.mrb[0].mxu0
    %v1913 = vadd.f32 0.0, %v1912
    %v1914 = vpop.f32.mrb[0].mxu0
    %1915 = vmatprep.mubr.f32.mxu0 %v1844
    %1916 = vmatmul.mubr.f32.gmra.mrb[0].mxu0 %v1838
    %v1917 = vpop.f32.mrb[0].mxu0
    %v1918 = vadd.f32 0.0, %v1917
    %v1919 = vpop.f32.mrb[0].mxu0
    %1920 = vdwg.mxu0
    %v1921 = vld [vmem:[%s16] sm:$0x3f]
    %v1922 = vld [vmem:[%s17] sm:$0xff]
    %v1923 = vld [vmem:[%s17 + $0x8] sm:$0x3]
    %vm1924 = vcmask 80896
    %v1926 = vsel %vm1924, %v1828, 0
    %v1929 = vsel %vm1924, %v1833, 0
    %vm1931 = vcmask 1041408
    %v1933 = vsel %vm1931, %v1923, 0
    %1935 = vmatprep.subr.mxu0 0.0
    %1936 = vmatpush1.msra.mxu0 %v1922
    %1937 = vmatprep.subr.mxu0 0.0
    %1938 = vmatpush1.msra.mxu0 %v1933
    %1939 = vmatprep.subr.mxu0 0.0
    %1940 = vmatpush1.msra.mxu0 0.0
    %1941 = vmatprep.subr.mxu0 0.0
    %1942 = vmatpush1.msra.mxu0 0.0
    %1943 = vmatprep.subr.mxu0 0.0
    %1944 = vmatpush1.msra.mxu0 0.0
    %1945 = vmatprep.subr.mxu0 0.0
    %1946 = vmatpush1.msra.mxu0 0.0
    %1947 = vmatprep.subr.mxu0 0.0
    %1948 = vmatpush1.msra.mxu0 0.0
    %1949 = vmatprep.subr.mxu0 0.0
    %1950 = vmatpush1.msra.mxu0 0.0
    %1951 = vmatprep.subr.mxu0 0.0
    %1952 = vmatpush1.msra.mxu0 0.0
    %1953 = vmatprep.subr.mxu0 0.0
    %1954 = vmatpush1.msra.mxu0 0.0
    %1955 = vmatprep.subr.mxu0 0.0
    %1956 = vmatpush1.msra.mxu0 0.0
    %1957 = vmatprep.subr.mxu0 0.0
    %1958 = vmatpush1.msra.mxu0 0.0
    %1959 = vmatprep.subr.mxu0 0.0
    %1960 = vmatpush1.msra.mxu0 0.0
    %1961 = vmatprep.subr.mxu0 0.0
    %1962 = vmatpush1.msra.mxu0 0.0
    %1963 = vmatprep.subr.mxu0 0.0
    %1964 = vmatpush1.msra.mxu0 0.0
    %1965 = vmatprep.subr.mxu0 0.0
    %1966 = vmatpush1.msra.mxu0 0.0
    %1967 = vmatprep.subr.mxu0 0.0
    %1968 = vmatpush1.msra.mxu0 0.0
    %1969 = vmatprep.subr.mxu0 0.0
    %1970 = vmatpush1.msra.mxu0 0.0
    %1971 = vmatprep.subr.mxu0 0.0
    %1972 = vmatpush1.msra.mxu0 0.0
    %1973 = vmatprep.subr.mxu0 0.0
    %1974 = vmatpush1.msra.mxu0 0.0
    %1975 = vmatprep.subr.mxu0 0.0
    %1976 = vmatpush1.msra.mxu0 0.0
    %1977 = vmatprep.subr.mxu0 0.0
    %1978 = vmatpush1.msra.mxu0 0.0
    %1979 = vmatprep.subr.mxu0 0.0
    %1980 = vmatpush1.msra.mxu0 0.0
    %1981 = vmatprep.subr.mxu0 0.0
    %1982 = vmatpush1.msra.mxu0 0.0
    %1983 = vmatprep.subr.mxu0 0.0
    %1984 = vmatpush1.msra.mxu0 0.0
    %1985 = vmatprep.subr.mxu0 0.0
    %1986 = vmatpush1.msra.mxu0 0.0
    %1987 = vmatprep.subr.mxu0 0.0
    %1988 = vmatpush1.msra.mxu0 0.0
    %1989 = vmatprep.subr.mxu0 0.0
    %1990 = vmatpush1.msra.mxu0 0.0
    %1991 = vmatprep.subr.mxu0 0.0
    %1992 = vmatpush1.msra.mxu0 0.0
    %1993 = vmatprep.subr.mxu0 0.0
    %1994 = vmatpush1.msra.mxu0 0.0
    %1995 = vmatprep.subr.mxu0 0.0
    %1996 = vmatpush1.msra.mxu0 0.0
    %1997 = vmatprep.subr.mxu0 0.0
    %1998 = vmatpush1.msra.mxu0 0.0
    %1999 = vmatprep.mubr.f32.mxu0 0.0
    %2000 = vmatmul.mubr.f32.gmra.mrb[0].mxu0 %v1926
    %v2001 = vpop.f32.mrb[0].mxu0
    %v2002 = vadd.f32 0.0, %v2001
    %v2003 = vpop.f32.mrb[0].mxu0
    %2004 = vmatprep.mubr.f32.mxu0 0.0
    %2005 = vmatmul.mubr.f32.gmra.mrb[0].mxu0 %v1929
    %v2006 = vpop.f32.mrb[0].mxu0
    %v2007 = vadd.f32 0.0, %v2006
    %v2008 = vpop.f32.mrb[0].mxu0
    %2009 = vdwg.mxu0
    %v2011 = vsel %vm95, %v1921, 0
    %2013 = vmatprep.subr.mxu0 0.0
    %2014 = vmatpush1.msra.mxu0 %v2011
    %2015 = vmatprep.subr.mxu0 0.0
    %2016 = vmatpush1.msra.mxu0 0.0
    %2017 = vmatprep.subr.mxu0 0.0
    %2018 = vmatpush1.msra.mxu0 0.0
    %2019 = vmatprep.subr.mxu0 0.0
    %2020 = vmatpush1.msra.mxu0 0.0
    %2021 = vmatprep.subr.mxu0 0.0
    %2022 = vmatpush1.msra.mxu0 0.0
    %2023 = vmatprep.subr.mxu0 0.0
    %2024 = vmatpush1.msra.mxu0 0.0
    %2025 = vmatprep.subr.mxu0 0.0
    %2026 = vmatpush1.msra.mxu0 0.0
    %2027 = vmatprep.subr.mxu0 0.0
    %2028 = vmatpush1.msra.mxu0 0.0
    %2029 = vmatprep.subr.mxu0 0.0
    %2030 = vmatpush1.msra.mxu0 0.0
    %2031 = vmatprep.subr.mxu0 0.0
    %2032 = vmatpush1.msra.mxu0 0.0
    %2033 = vmatprep.subr.mxu0 0.0
    %2034 = vmatpush1.msra.mxu0 0.0
    %2035 = vmatprep.subr.mxu0 0.0
    %2036 = vmatpush1.msra.mxu0 0.0
    %2037 = vmatprep.subr.mxu0 0.0
    %2038 = vmatpush1.msra.mxu0 0.0
    %2039 = vmatprep.subr.mxu0 0.0
    %2040 = vmatpush1.msra.mxu0 0.0
    %2041 = vmatprep.subr.mxu0 0.0
    %2042 = vmatpush1.msra.mxu0 0.0
    %2043 = vmatprep.subr.mxu0 0.0
    %2044 = vmatpush1.msra.mxu0 0.0
    %2045 = vmatprep.subr.mxu0 0.0
    %2046 = vmatpush1.msra.mxu0 0.0
    %2047 = vmatprep.subr.mxu0 0.0
    %2048 = vmatpush1.msra.mxu0 0.0
    %2049 = vmatprep.subr.mxu0 0.0
    %2050 = vmatpush1.msra.mxu0 0.0
    %2051 = vmatprep.subr.mxu0 0.0
    %2052 = vmatpush1.msra.mxu0 0.0
    %2053 = vmatprep.subr.mxu0 0.0
    %2054 = vmatpush1.msra.mxu0 0.0
    %2055 = vmatprep.subr.mxu0 0.0
    %2056 = vmatpush1.msra.mxu0 0.0
    %2057 = vmatprep.subr.mxu0 0.0
    %2058 = vmatpush1.msra.mxu0 0.0
    %2059 = vmatprep.subr.mxu0 0.0
    %2060 = vmatpush1.msra.mxu0 0.0
    %2061 = vmatprep.subr.mxu0 0.0
    %2062 = vmatpush1.msra.mxu0 0.0
    %2063 = vmatprep.subr.mxu0 0.0
    %2064 = vmatpush1.msra.mxu0 0.0
    %2065 = vmatprep.subr.mxu0 0.0
    %2066 = vmatpush1.msra.mxu0 0.0
    %2067 = vmatprep.subr.mxu0 0.0
    %2068 = vmatpush1.msra.mxu0 0.0
    %2069 = vmatprep.subr.mxu0 0.0
    %2070 = vmatpush1.msra.mxu0 0.0
    %2071 = vmatprep.subr.mxu0 0.0
    %2072 = vmatpush1.msra.mxu0 0.0
    %2073 = vmatprep.subr.mxu0 0.0
    %2074 = vmatpush1.msra.mxu0 0.0
    %2075 = vmatprep.subr.mxu0 0.0
    %2076 = vmatpush1.msra.mxu0 0.0
    %2077 = vmatprep.mubr.f32.mxu0 0.0
    %2078 = vmatmul.mubr.f32.gmra.mrb[0].mxu0 %v90
    %v2079 = vpop.f32.mrb[0].mxu0
    %v2080 = vadd.f32 %v2002, %v2079
    %v2081 = vpop.f32.mrb[0].mxu0
    %2082 = vmatprep.mubr.f32.mxu0 0.0
    %2083 = vmatmul.mubr.f32.gmra.mrb[0].mxu0 %v93
    %v2084 = vpop.f32.mrb[0].mxu0
    %v2085 = vadd.f32 %v2007, %v2084
    %v2086 = vpop.f32.mrb[0].mxu0
    %2087 = vdwg.mxu0
    %v2088 = vld [vmem:[%s18] sm:$0xff]
    %v2089 = vld [vmem:[%s18 + $0x8] sm:$0x3]
    %v2091 = vsel %vm1924, %v1913, 0
    %v2094 = vsel %vm1924, %v1918, 0
    %v2097 = vsel %vm1931, %v2089, 0
    %2099 = vmatprep.subr.mxu0 0.0
    %2100 = vmatpush1.msra.mxu0 %v2088
    %2101 = vmatprep.subr.mxu0 0.0
    %2102 = vmatpush1.msra.mxu0 %v2097
    %2103 = vmatprep.subr.mxu0 0.0
    %2104 = vmatpush1.msra.mxu0 0.0
    %2105 = vmatprep.subr.mxu0 0.0
    %2106 = vmatpush1.msra.mxu0 0.0
    %2107 = vmatprep.subr.mxu0 0.0
    %2108 = vmatpush1.msra.mxu0 0.0
    %2109 = vmatprep.subr.mxu0 0.0
    %2110 = vmatpush1.msra.mxu0 0.0
    %2111 = vmatprep.subr.mxu0 0.0
    %2112 = vmatpush1.msra.mxu0 0.0
    %2113 = vmatprep.subr.mxu0 0.0
    %2114 = vmatpush1.msra.mxu0 0.0
    %2115 = vmatprep.subr.mxu0 0.0
    %2116 = vmatpush1.msra.mxu0 0.0
    %2117 = vmatprep.subr.mxu0 0.0
    %2118 = vmatpush1.msra.mxu0 0.0
    %2119 = vmatprep.subr.mxu0 0.0
    %2120 = vmatpush1.msra.mxu0 0.0
    %2121 = vmatprep.subr.mxu0 0.0
    %2122 = vmatpush1.msra.mxu0 0.0
    %2123 = vmatprep.subr.mxu0 0.0
    %2124 = vmatpush1.msra.mxu0 0.0
    %2125 = vmatprep.subr.mxu0 0.0
    %2126 = vmatpush1.msra.mxu0 0.0
    %2127 = vmatprep.subr.mxu0 0.0
    %2128 = vmatpush1.msra.mxu0 0.0
    %2129 = vmatprep.subr.mxu0 0.0
    %2130 = vmatpush1.msra.mxu0 0.0
    %2131 = vmatprep.subr.mxu0 0.0
    %2132 = vmatpush1.msra.mxu0 0.0
    %2133 = vmatprep.subr.mxu0 0.0
    %2134 = vmatpush1.msra.mxu0 0.0
    %2135 = vmatprep.subr.mxu0 0.0
    %2136 = vmatpush1.msra.mxu0 0.0
    %2137 = vmatprep.subr.mxu0 0.0
    %2138 = vmatpush1.msra.mxu0 0.0
    %2139 = vmatprep.subr.mxu0 0.0
    %2140 = vmatpush1.msra.mxu0 0.0
    %2141 = vmatprep.subr.mxu0 0.0
    %2142 = vmatpush1.msra.mxu0 0.0
    %2143 = vmatprep.subr.mxu0 0.0
    %2144 = vmatpush1.msra.mxu0 0.0
    %2145 = vmatprep.subr.mxu0 0.0
    %2146 = vmatpush1.msra.mxu0 0.0
    %2147 = vmatprep.subr.mxu0 0.0
    %2148 = vmatpush1.msra.mxu0 0.0
    %2149 = vmatprep.subr.mxu0 0.0
    %2150 = vmatpush1.msra.mxu0 0.0
    %2151 = vmatprep.subr.mxu0 0.0
    %2152 = vmatpush1.msra.mxu0 0.0
    %2153 = vmatprep.subr.mxu0 0.0
    %2154 = vmatpush1.msra.mxu0 0.0
    %2155 = vmatprep.subr.mxu0 0.0
    %2156 = vmatpush1.msra.mxu0 0.0
    %2157 = vmatprep.subr.mxu0 0.0
    %2158 = vmatpush1.msra.mxu0 0.0
    %2159 = vmatprep.subr.mxu0 0.0
    %2160 = vmatpush1.msra.mxu0 0.0
    %2161 = vmatprep.subr.mxu0 0.0
    %2162 = vmatpush1.msra.mxu0 0.0
    %2163 = vmatprep.mubr.f32.mxu0 0.0
    %2164 = vmatmul.mubr.f32.gmra.mrb[0].mxu0 %v2091
    %v2165 = vpop.f32.mrb[0].mxu0
    %v2166 = vadd.f32 0.0, %v2165
    %v2167 = vpop.f32.mrb[0].mxu0
    %2168 = vmatprep.mubr.f32.mxu0 0.0
    %2169 = vmatmul.mubr.f32.gmra.mrb[0].mxu0 %v2094
    %v2170 = vpop.f32.mrb[0].mxu0
    %v2171 = vadd.f32 0.0, %v2170
    %v2172 = vpop.f32.mrb[0].mxu0
    %2173 = vdwg.mxu0
    %v2174 = vadd.f32 %v2080, %v2166
    %v2175 = vadd.f32 %v2085, %v2171
    %v2176 = vld [vmem:[%s19] sm:$0x1]
    %v2178 = vlaneseq
    %v2179 = vshrl.u32 %v2178, 7
    %v2180 = vsub.s32 0, %v2179
    %v2181 = vrot.slane %v2176, %v2180
    %v2183 = vadd.f32 %v2174, %v2181
    %v2184 = vadd.f32 %v2175, %v2181
    %v2185 = vmax.f32 %v2183, 0.0
    %v2186 = vmax.f32 %v2184, 0.0
    %v2187 = vld [vmem:[%s20] sm:$0xff]
    %v2188 = vld [vmem:[%s20 + $0x8] sm:$0xff]
    %v2189 = vld [vmem:[%s20 + $0x10] sm:$0xff]
    %v2190 = vld [vmem:[%s20 + $0x18] sm:$0xff]
    %v2191 = vld [vmem:[%s21] sm:$0x1]
    %v2193 = vlaneseq
    %v2194 = vshrl.u32 %v2193, 7
    %v2195 = vsub.s32 0, %v2194
    %v2196 = vrot.slane %v2191, %v2195
    %v2199 = vsel %vm1486, %v2185, 0
    %v2202 = vsel %vm1486, %v2186, 0
    %2204 = vmatprep.subr.mxu0 0.0
    %2205 = vmatpush1.msra.mxu0 %v2187
    %2206 = vmatprep.subr.mxu0 0.0
    %2207 = vmatpush1.msra.mxu0 %v2188
    %2208 = vmatprep.subr.mxu0 0.0
    %2209 = vmatpush1.msra.mxu0 %v2189
    %2210 = vmatprep.subr.mxu0 0.0
    %2211 = vmatpush1.msra.mxu0 %v2190
    %2212 = vmatprep.subr.mxu0 0.0
    %2213 = vmatpush1.msra.mxu0 0.0
    %2214 = vmatprep.subr.mxu0 0.0
    %2215 = vmatpush1.msra.mxu0 0.0
    %2216 = vmatprep.subr.mxu0 0.0
    %2217 = vmatpush1.msra.mxu0 0.0
    %2218 = vmatprep.subr.mxu0 0.0
    %2219 = vmatpush1.msra.mxu0 0.0
    %2220 = vmatprep.subr.mxu0 0.0
    %2221 = vmatpush1.msra.mxu0 0.0
    %2222 = vmatprep.subr.mxu0 0.0
    %2223 = vmatpush1.msra.mxu0 0.0
    %2224 = vmatprep.subr.mxu0 0.0
    %2225 = vmatpush1.msra.mxu0 0.0
    %2226 = vmatprep.subr.mxu0 0.0
    %2227 = vmatpush1.msra.mxu0 0.0
    %2228 = vmatprep.subr.mxu0 0.0
    %2229 = vmatpush1.msra.mxu0 0.0
    %2230 = vmatprep.subr.mxu0 0.0
    %2231 = vmatpush1.msra.mxu0 0.0
    %2232 = vmatprep.subr.mxu0 0.0
    %2233 = vmatpush1.msra.mxu0 0.0
    %2234 = vmatprep.subr.mxu0 0.0
    %2235 = vmatpush1.msra.mxu0 0.0
    %2236 = vmatprep.subr.mxu0 0.0
    %2237 = vmatpush1.msra.mxu0 0.0
    %2238 = vmatprep.subr.mxu0 0.0
    %2239 = vmatpush1.msra.mxu0 0.0
    %2240 = vmatprep.subr.mxu0 0.0
    %2241 = vmatpush1.msra.mxu0 0.0
    %2242 = vmatprep.subr.mxu0 0.0
    %2243 = vmatpush1.msra.mxu0 0.0
    %2244 = vmatprep.subr.mxu0 0.0
    %2245 = vmatpush1.msra.mxu0 0.0
    %2246 = vmatprep.subr.mxu0 0.0
    %2247 = vmatpush1.msra.mxu0 0.0
    %2248 = vmatprep.subr.mxu0 0.0
    %2249 = vmatpush1.msra.mxu0 0.0
    %2250 = vmatprep.subr.mxu0 0.0
    %2251 = vmatpush1.msra.mxu0 0.0
    %2252 = vmatprep.subr.mxu0 0.0
    %2253 = vmatpush1.msra.mxu0 0.0
    %2254 = vmatprep.subr.mxu0 0.0
    %2255 = vmatpush1.msra.mxu0 0.0
    %2256 = vmatprep.subr.mxu0 0.0
    %2257 = vmatpush1.msra.mxu0 0.0
    %2258 = vmatprep.subr.mxu0 0.0
    %2259 = vmatpush1.msra.mxu0 0.0
    %2260 = vmatprep.subr.mxu0 0.0
    %2261 = vmatpush1.msra.mxu0 0.0
    %2262 = vmatprep.subr.mxu0 0.0
    %2263 = vmatpush1.msra.mxu0 0.0
    %2264 = vmatprep.subr.mxu0 0.0
    %2265 = vmatpush1.msra.mxu0 0.0
    %2266 = vmatprep.subr.mxu0 0.0
    %2267 = vmatpush1.msra.mxu0 0.0
    %2268 = vmatprep.mubr.f32.mxu0 0.0
    %2269 = vmatmul.mubr.f32.gmra.mrb[0].mxu0 %v2199
    %v2270 = vpop.f32.mrb[0].mxu0
    %v2271 = vadd.f32 %v2196, %v2270
    %v2272 = vpop.f32.mrb[0].mxu0
    %2273 = vmatprep.mubr.f32.mxu0 0.0
    %2274 = vmatmul.mubr.f32.gmra.mrb[0].mxu0 %v2202
    %v2275 = vpop.f32.mrb[0].mxu0
    %v2276 = vadd.f32 %v2196, %v2275
    %v2277 = vpop.f32.mrb[0].mxu0
    %2278 = vdwg.mxu0
    %v2279 = vmax.f32 %v2271, 0.0
    %v2280 = vmax.f32 %v2276, 0.0
    %v2281 = vld [vmem:[%s22] sm:$0xff]
    %v2282 = vld [vmem:[%s22 + $0x8] sm:$0xff]
    %v2283 = vld [vmem:[%s23] sm:$0x1]
    %v2285 = vlaneseq
    %v2286 = vshrl.u32 %v2285, 7
    %v2287 = vsub.s32 0, %v2286
    %v2288 = vrot.slane %v2283, %v2287
    %v2291 = vsel %vm376, %v2279, 0
    %v2294 = vsel %vm376, %v2280, 0
    %2296 = vmatprep.subr.mxu0 0.0
    %2297 = vmatpush1.msra.mxu0 %v2281
    %2298 = vmatprep.subr.mxu0 0.0
    %2299 = vmatpush1.msra.mxu0 %v2282
    %2300 = vmatprep.subr.mxu0 0.0
    %2301 = vmatpush1.msra.mxu0 0.0
    %2302 = vmatprep.subr.mxu0 0.0
    %2303 = vmatpush1.msra.mxu0 0.0
    %2304 = vmatprep.subr.mxu0 0.0
    %2305 = vmatpush1.msra.mxu0 0.0
    %2306 = vmatprep.subr.mxu0 0.0
    %2307 = vmatpush1.msra.mxu0 0.0
    %2308 = vmatprep.subr.mxu0 0.0
    %2309 = vmatpush1.msra.mxu0 0.0
    %2310 = vmatprep.subr.mxu0 0.0
    %2311 = vmatpush1.msra.mxu0 0.0
    %2312 = vmatprep.subr.mxu0 0.0
    %2313 = vmatpush1.msra.mxu0 0.0
    %2314 = vmatprep.subr.mxu0 0.0
    %2315 = vmatpush1.msra.mxu0 0.0
    %2316 = vmatprep.subr.mxu0 0.0
    %2317 = vmatpush1.msra.mxu0 0.0
    %2318 = vmatprep.subr.mxu0 0.0
    %2319 = vmatpush1.msra.mxu0 0.0
    %2320 = vmatprep.subr.mxu0 0.0
    %2321 = vmatpush1.msra.mxu0 0.0
    %2322 = vmatprep.subr.mxu0 0.0
    %2323 = vmatpush1.msra.mxu0 0.0
    %2324 = vmatprep.subr.mxu0 0.0
    %2325 = vmatpush1.msra.mxu0 0.0
    %2326 = vmatprep.subr.mxu0 0.0
    %2327 = vmatpush1.msra.mxu0 0.0
    %2328 = vmatprep.subr.mxu0 0.0
    %2329 = vmatpush1.msra.mxu0 0.0
    %2330 = vmatprep.subr.mxu0 0.0
    %2331 = vmatpush1.msra.mxu0 0.0
    %2332 = vmatprep.subr.mxu0 0.0
    %2333 = vmatpush1.msra.mxu0 0.0
    %2334 = vmatprep.subr.mxu0 0.0
    %2335 = vmatpush1.msra.mxu0 0.0
    %2336 = vmatprep.subr.mxu0 0.0
    %2337 = vmatpush1.msra.mxu0 0.0
    %2338 = vmatprep.subr.mxu0 0.0
    %2339 = vmatpush1.msra.mxu0 0.0
    %2340 = vmatprep.subr.mxu0 0.0
    %2341 = vmatpush1.msra.mxu0 0.0
    %2342 = vmatprep.subr.mxu0 0.0
    %2343 = vmatpush1.msra.mxu0 0.0
    %2344 = vmatprep.subr.mxu0 0.0
    %2345 = vmatpush1.msra.mxu0 0.0
    %2346 = vmatprep.subr.mxu0 0.0
    %2347 = vmatpush1.msra.mxu0 0.0
    %2348 = vmatprep.subr.mxu0 0.0
    %2349 = vmatpush1.msra.mxu0 0.0
    %2350 = vmatprep.subr.mxu0 0.0
    %2351 = vmatpush1.msra.mxu0 0.0
    %2352 = vmatprep.subr.mxu0 0.0
    %2353 = vmatpush1.msra.mxu0 0.0
    %2354 = vmatprep.subr.mxu0 0.0
    %2355 = vmatpush1.msra.mxu0 0.0
    %2356 = vmatprep.subr.mxu0 0.0
    %2357 = vmatpush1.msra.mxu0 0.0
    %2358 = vmatprep.subr.mxu0 0.0
    %2359 = vmatpush1.msra.mxu0 0.0
    %2360 = vmatprep.mubr.f32.mxu0 0.0
    %2361 = vmatmul.mubr.f32.gmra.mrb[0].mxu0 %v2291
    %v2362 = vpop.f32.mrb[0].mxu0
    %v2363 = vadd.f32 %v2288, %v2362
    %v2364 = vpop.f32.mrb[0].mxu0
    %2365 = vmatprep.mubr.f32.mxu0 0.0
    %2366 = vmatmul.mubr.f32.gmra.mrb[0].mxu0 %v2294
    %v2367 = vpop.f32.mrb[0].mxu0
    %v2368 = vadd.f32 %v2288, %v2367
    %v2369 = vpop.f32.mrb[0].mxu0
    %2370 = vdwg.mxu0
    %v2371 = vmax.f32 %v2363, 0.0
    %v2372 = vmax.f32 %v2368, 0.0
    %v2373 = vld [vmem:[%s7] sm:$0x3]
    %v2375 = vsel %vm376, %v2373, 0
    %2377 = vmatprep.subr.mxu0 0.0
    %2378 = vmatpush1.msra.mxu0 %v2371
    %2379 = vmatprep.subr.mxu0 0.0
    %2380 = vmatpush1.msra.mxu0 %v2372
    %2381 = vmatprep.subr.mxu0 0.0
    %2382 = vmatpush1.msra.mxu0 0.0
    %2383 = vmatprep.subr.mxu0 0.0
    %2384 = vmatpush1.msra.mxu0 0.0
    %2385 = vmatprep.subr.mxu0 0.0
    %2386 = vmatpush1.msra.mxu0 0.0
    %2387 = vmatprep.subr.mxu0 0.0
    %2388 = vmatpush1.msra.mxu0 0.0
    %2389 = vmatprep.subr.mxu0 0.0
    %2390 = vmatpush1.msra.mxu0 0.0
    %2391 = vmatprep.subr.mxu0 0.0
    %2392 = vmatpush1.msra.mxu0 0.0
    %2393 = vmatprep.subr.mxu0 0.0
    %2394 = vmatpush1.msra.mxu0 0.0
    %2395 = vmatprep.subr.mxu0 0.0
    %2396 = vmatpush1.msra.mxu0 0.0
    %2397 = vmatprep.subr.mxu0 0.0
    %2398 = vmatpush1.msra.mxu0 0.0
    %2399 = vmatprep.subr.mxu0 0.0
    %2400 = vmatpush1.msra.mxu0 0.0
    %2401 = vmatprep.subr.mxu0 0.0
    %2402 = vmatpush1.msra.mxu0 0.0
    %2403 = vmatprep.subr.mxu0 0.0
    %2404 = vmatpush1.msra.mxu0 0.0
    %2405 = vmatprep.subr.mxu0 0.0
    %2406 = vmatpush1.msra.mxu0 0.0
    %2407 = vmatprep.subr.mxu0 0.0
    %2408 = vmatpush1.msra.mxu0 0.0
    %2409 = vmatprep.subr.mxu0 0.0
    %2410 = vmatpush1.msra.mxu0 0.0
    %2411 = vmatprep.subr.mxu0 0.0
    %2412 = vmatpush1.msra.mxu0 0.0
    %2413 = vmatprep.subr.mxu0 0.0
    %2414 = vmatpush1.msra.mxu0 0.0
    %2415 = vmatprep.subr.mxu0 0.0
    %2416 = vmatpush1.msra.mxu0 0.0
    %2417 = vmatprep.subr.mxu0 0.0
    %2418 = vmatpush1.msra.mxu0 0.0
    %2419 = vmatprep.subr.mxu0 0.0
    %2420 = vmatpush1.msra.mxu0 0.0
    %2421 = vmatprep.subr.mxu0 0.0
    %2422 = vmatpush1.msra.mxu0 0.0
    %2423 = vmatprep.subr.mxu0 0.0
    %2424 = vmatpush1.msra.mxu0 0.0
    %2425 = vmatprep.subr.mxu0 0.0
    %2426 = vmatpush1.msra.mxu0 0.0
    %2427 = vmatprep.subr.mxu0 0.0
    %2428 = vmatpush1.msra.mxu0 0.0
    %2429 = vmatprep.subr.mxu0 0.0
    %2430 = vmatpush1.msra.mxu0 0.0
    %2431 = vmatprep.subr.mxu0 0.0
    %2432 = vmatpush1.msra.mxu0 0.0
    %2433 = vmatprep.subr.mxu0 0.0
    %2434 = vmatpush1.msra.mxu0 0.0
    %2435 = vmatprep.subr.mxu0 0.0
    %2436 = vmatpush1.msra.mxu0 0.0
    %2437 = vmatprep.subr.mxu0 0.0
    %2438 = vmatpush1.msra.mxu0 0.0
    %2439 = vmatprep.subr.mxu0 0.0
    %2440 = vmatpush1.msra.mxu0 0.0
    %2441 = vmatprep.mubr.f32.mxu0 0.0
    %2442 = vmatmul.mubr.f32.gmra.mrb[0].mxu0 %v2375
    %v2443 = vpop.f32.mrb[0].mxu0
    %v2444 = vadd.f32 0.0, %v2443
    %v2445 = vpop.f32.mrb[0].mxu0
    %2446 = vdwg.mxu0
    %v2447 = vld [vmem:[%s24] sm:$0x3f]
    %v2448 = vld [vmem:[%s25] sm:$0x1]
    %v2450 = vlaneseq
    %v2451 = vshrl.u32 %v2450, 7
    %v2452 = vsub.s32 0, %v2451
    %v2453 = vrot.slane %v2448, %v2452
    %v2456 = vsel %vm88, %v2444, 0
    %v2459 = vsel %vm95, %v2447, 0
    %2461 = vmatprep.subr.mxu0 0.0
    %2462 = vmatpush1.msra.mxu0 %v2459
    %2463 = vmatprep.subr.mxu0 0.0
    %2464 = vmatpush1.msra.mxu0 0.0
    %2465 = vmatprep.subr.mxu0 0.0
    %2466 = vmatpush1.msra.mxu0 0.0
    %2467 = vmatprep.subr.mxu0 0.0
    %2468 = vmatpush1.msra.mxu0 0.0
    %2469 = vmatprep.subr.mxu0 0.0
    %2470 = vmatpush1.msra.mxu0 0.0
    %2471 = vmatprep.subr.mxu0 0.0
    %2472 = vmatpush1.msra.mxu0 0.0
    %2473 = vmatprep.subr.mxu0 0.0
    %2474 = vmatpush1.msra.mxu0 0.0
    %2475 = vmatprep.subr.mxu0 0.0
    %2476 = vmatpush1.msra.mxu0 0.0
    %2477 = vmatprep.subr.mxu0 0.0
    %2478 = vmatpush1.msra.mxu0 0.0
    %2479 = vmatprep.subr.mxu0 0.0
    %2480 = vmatpush1.msra.mxu0 0.0
    %2481 = vmatprep.subr.mxu0 0.0
    %2482 = vmatpush1.msra.mxu0 0.0
    %2483 = vmatprep.subr.mxu0 0.0
    %2484 = vmatpush1.msra.mxu0 0.0
    %2485 = vmatprep.subr.mxu0 0.0
    %2486 = vmatpush1.msra.mxu0 0.0
    %2487 = vmatprep.subr.mxu0 0.0
    %2488 = vmatpush1.msra.mxu0 0.0
    %2489 = vmatprep.subr.mxu0 0.0
    %2490 = vmatpush1.msra.mxu0 0.0
    %2491 = vmatprep.subr.mxu0 0.0
    %2492 = vmatpush1.msra.mxu0 0.0
    %2493 = vmatprep.subr.mxu0 0.0
    %2494 = vmatpush1.msra.mxu0 0.0
    %2495 = vmatprep.subr.mxu0 0.0
    %2496 = vmatpush1.msra.mxu0 0.0
    %2497 = vmatprep.subr.mxu0 0.0
    %2498 = vmatpush1.msra.mxu0 0.0
    %2499 = vmatprep.subr.mxu0 0.0
    %2500 = vmatpush1.msra.mxu0 0.0
    %2501 = vmatprep.subr.mxu0 0.0
    %2502 = vmatpush1.msra.mxu0 0.0
    %2503 = vmatprep.subr.mxu0 0.0
    %2504 = vmatpush1.msra.mxu0 0.0
    %2505 = vmatprep.subr.mxu0 0.0
    %2506 = vmatpush1.msra.mxu0 0.0
    %2507 = vmatprep.subr.mxu0 0.0
    %2508 = vmatpush1.msra.mxu0 0.0
    %2509 = vmatprep.subr.mxu0 0.0
    %2510 = vmatpush1.msra.mxu0 0.0
    %2511 = vmatprep.subr.mxu0 0.0
    %2512 = vmatpush1.msra.mxu0 0.0
    %2513 = vmatprep.subr.mxu0 0.0
    %2514 = vmatpush1.msra.mxu0 0.0
    %2515 = vmatprep.subr.mxu0 0.0
    %2516 = vmatpush1.msra.mxu0 0.0
    %2517 = vmatprep.subr.mxu0 0.0
    %2518 = vmatpush1.msra.mxu0 0.0
    %2519 = vmatprep.subr.mxu0 0.0
    %2520 = vmatpush1.msra.mxu0 0.0
    %2521 = vmatprep.subr.mxu0 0.0
    %2522 = vmatpush1.msra.mxu0 0.0
    %2523 = vmatprep.subr.mxu0 0.0
    %2524 = vmatpush1.msra.mxu0 0.0
    %2525 = vmatprep.mubr.f32.mxu0 0.0
    %2526 = vmatmul.mubr.f32.gmra.mrb[0].mxu0 %v2456
    %v2527 = vpop.f32.mrb[0].mxu0
    %v2528 = vadd.f32 %v2453, %v2527
    %v2529 = vpop.f32.mrb[0].mxu0
    %2530 = vdwg.mxu0
    %vm2531 = vcmask 17408
    %2532 = vst.msk [vmem:[#allocation2] sm:$0x3] %vm2531, %v2528
    // Predicated region
    $region106: #{tpu_custom_call.1} parent=1 // pred_check
      _
    $region107: #{tpu_custom_call.1} parent=1 // pred_check_branch
      %2534 = sbr.rel (0) target = $region109
    $region108: #{tpu_custom_call.1} parent=1 // pred_region
      %s2536 = ssub.s32 32, 32
      %2537 = vsyncadd [#allocation3], %s2536
      %s2539 = sshll.u32 [#allocation2], 4
      %s2540 = int_to_ptr.vmem [resolvable:$true] %s2539
      %2542 = dma.vmem_to_hbm [thread:$0]  %s2540, 32, %s26, [#allocation3]
    $region109: #{tpu_custom_call.1} parent=1 // pred_fallthru
      _
    // Predicated region
    $region110: #{tpu_custom_call.1} parent=1 // pred_check
      _
    $region111: #{tpu_custom_call.1} parent=1 // pred_check_branch
      %2544 = sbr.rel (0) target = $region113
    $region112: #{tpu_custom_call.1} parent=1 // pred_region
      %2545 = dma.done [#allocation3], 32
    $region113: #{tpu_custom_call.1} parent=1 // pred_fallthru
      _
    %2546 = vsyncpa [#allocation3], 1

</llo_original>
